<compile_context>
chip_gen: v7x
topology: tpu7x:2x2x1
jax: 0.10.0
libtpu: 0.0.40
codegen_flags: <defaults>
</compile_context>

<pallas_src>
import functools

import jax
import jax.numpy as jnp
from jax.experimental import pallas as pl
from jax.experimental.pallas import tpu as pltpu


def make_lstm_kernel(num_layers, T, Bt, H, D):
    """Builds the Pallas kernel. Ref order:
       x_ref, [wih_l, whh_l, b_l] * num_layers, wfc_ref, bfc_ref, out_ref,
       seq_scratch, pre_scratch
    """
    G = 4 * H  # fused gate width (columns: [i | f | g | o])

    def kernel(*refs):
        x_ref = refs[0]                                    # (1, T*Bt, D)   VMEM block
        layer_refs = refs[1:1 + 3 * num_layers]
        wfc_ref = refs[1 + 3 * num_layers]                 # (H, O)
        bfc_ref = refs[2 + 3 * num_layers]                 # (1, O)
        out_ref = refs[3 + 3 * num_layers]                 # (1, Bt, O)
        seq_ref = refs[4 + 3 * num_layers]                 # (T*Bt, H) scratch: layer output seq
        pre_ref = refs[5 + 3 * num_layers]                 # (T*Bt, 4H) scratch: input projection

        # Per-lane affine applied after one whole-tile tanh.  The i/f/o preactivation columns
        # were pre-scaled by 0.5 at init, so sigmoid(x) = 0.5*tanh(x/2) + 0.5 = 0.5*t + 0.5,
        # while the g columns keep tanh(x) = 1.0*t + 0.0.  Hoisted outside all loops.
        lane = jax.lax.broadcasted_iota(jnp.int32, (1, G), 1)
        is_g = jnp.logical_and(lane >= 2 * H, lane < 3 * H)
        act_scale = jnp.where(is_g, 1.0, 0.5).astype(jnp.float32)   # (1, 4H)
        act_shift = jnp.where(is_g, 0.0, 0.5).astype(jnp.float32)   # (1, 4H)

        h_last = None
        for l in range(num_layers):                        # static unroll over layers
            wih = layer_refs[3 * l][...]                   # (Din_l, 4H)
            # cast once per layer -> single native bf16 MXU pass per timestep
            whh = layer_refs[3 * l + 1][...].astype(jnp.bfloat16)   # (H, 4H)
            b = layer_refs[3 * l + 2][...]                 # (1, 4H)

            # Whole-sequence input projection: one lane-dense GEMM, bias folded in.
            if l == 0:
                x_seq = x_ref[0]                           # (T*Bt, D)
            else:
                x_seq = seq_ref[...]                       # (T*Bt, H) = previous layer's output
            pre_ref[...] = (jnp.dot(x_seq, wih,
                                    preferred_element_type=jnp.float32) + b)

            def step(t, carry, whh=whh):
                h, c = carry                               # (Bt, H) f32, (Bt, H) f32
                row = pl.multiple_of(t * Bt, Bt)
                g_pre = pre_ref[pl.ds(row, Bt), :] + jnp.dot(
                    h.astype(jnp.bfloat16), whh,
                    preferred_element_type=jnp.float32)    # (Bt, 4H) f32
                # single whole-tile tanh + per-lane affine replaces 3 sigmoids + 1 tanh
                act = jnp.tanh(g_pre) * act_scale + act_shift
                i_g = act[:, 0 * H:1 * H]
                f_g = act[:, 1 * H:2 * H]
                g_g = act[:, 2 * H:3 * H]
                o_g = act[:, 3 * H:4 * H]
                c_new = f_g * c + i_g * g_g
                h_new = o_g * jnp.tanh(c_new)
                seq_ref[pl.ds(row, Bt), :] = h_new         # layer output sequence
                return (h_new, c_new)

            h0 = jnp.zeros((Bt, H), jnp.float32)
            c0 = jnp.zeros((Bt, H), jnp.float32)
            # T is small and static -> fully unroll so the scheduler sees across iterations.
            h_last, _ = jax.lax.fori_loop(0, T, step, (h0, c0), unroll=True)

        # fc on last timestep of top layer, taken from the loop carry (no reload).
        out_ref[0] = (jnp.dot(h_last, wfc_ref[...],
                              preferred_element_type=jnp.float32)
                      + bfc_ref[...])

    return kernel


def init_params(key, num_layers, input_size, hidden_size, output_size):
    """Deterministic init mirroring the PyTorch module:
       weight_ih -> xavier_uniform, weight_hh -> orthogonal, LSTM biases -> 0.
       Weights are stored fused & transposed: (Din, 4H), (H, 4H), (1, 4H).
       The i/f/o gate columns are pre-scaled by 0.5 so the kernel can evaluate the
       sigmoids with one whole-tile tanh (sigmoid(x) = 0.5*tanh(x/2) + 0.5)."""
    H = hidden_size
    glorot = jax.nn.initializers.glorot_uniform()
    ortho = jax.nn.initializers.orthogonal()
    # column scale: 0.5 on i/f/o columns, 1.0 on g columns (gate order i,f,g,o)
    col_scale = jnp.concatenate([jnp.full((1, H), 0.5, jnp.float32),
                                 jnp.full((1, H), 0.5, jnp.float32),
                                 jnp.ones((1, H), jnp.float32),
                                 jnp.full((1, H), 0.5, jnp.float32)], axis=1)
    params = []
    for l in range(num_layers):
        din = input_size if l == 0 else H
        key, k1, k2 = jax.random.split(key, 3)
        # PyTorch weight_ih_l{l}: (4H, Din), row blocks in gate order i,f,g,o
        w_ih = glorot(k1, (4 * H, din), jnp.float32)
        w_hh = ortho(k2, (4 * H, H), jnp.float32)
        # transpose -> lane-dense fused layouts for x @ W, with the 0.5 fold on i/f/o columns
        params += [w_ih.T * col_scale,                            # (Din, 4H)
                   w_hh.T * col_scale,                            # (H, 4H)
                   jnp.zeros((1, 4 * H), jnp.float32)]            # biases = 0 (0.5*0 = 0)
    key, k3, k4 = jax.random.split(key, 3)
    bound = 1.0 / (H ** 0.5)
    w_fc = jax.random.uniform(k3, (H, output_size), jnp.float32, -bound, bound)
    b_fc = jax.random.uniform(k4, (1, output_size), jnp.float32, -bound, bound)
    params += [w_fc, b_fc]
    return params


@functools.partial(jax.jit, static_argnames=("num_layers", "hidden_size", "output_size"))
def rnn_forward(x, params, *, num_layers, hidden_size, output_size):
    """x: (B, T, D) batch-first, float32. Returns (B, output_size)."""
    B, T, D = x.shape
    assert T >= 1, "sequence length must be >= 1"
    H, O = hidden_size, output_size

    Bt = 8                                     # batch rows per grid tile (sublane multiple)
    nbt = max(1, (B + Bt - 1) // Bt)           # number of batch tiles -> parallel grid axis
    Bp = nbt * Bt

    # (B,T,D) -> pad batch -> (nbt, T*Bt, D), time-major within each batch tile.
    xp = jnp.pad(x, ((0, Bp - B), (0, 0), (0, 0))) if Bp != B else x
    x_tiles = (xp.reshape(nbt, Bt, T, D)
                 .transpose(0, 2, 1, 3)        # (nbt, T, Bt, D)
                 .reshape(nbt, T * Bt, D))

    weight_spec = pl.BlockSpec(memory_space=pltpu.MemorySpace.VMEM)  # whole array, resident
    n_w = 3 * num_layers + 2

    out = pl.pallas_call(
        make_lstm_kernel(num_layers, T, Bt, H, D),
        out_shape=jax.ShapeDtypeStruct((nbt, Bt, O), jnp.float32),
        grid=(nbt,),
        in_specs=[pl.BlockSpec((1, T * Bt, D), lambda j: (j, 0, 0))] + [weight_spec] * n_w,
        out_specs=pl.BlockSpec((1, Bt, O), lambda j: (j, 0, 0)),
        scratch_shapes=[pltpu.VMEM((T * Bt, H), jnp.float32),        # layer output sequence
                        pltpu.VMEM((T * Bt, 4 * H), jnp.float32)],   # fused input projection
        compiler_params=pltpu.CompilerParams(
            dimension_semantics=("parallel",)),                      # batch tiles across cores
    )(x_tiles, *params)
    return out.reshape(Bp, O)[:B]


if __name__ == "__main__":
    # module hyperparameters (small, consistent with the forward pass)
    num_layers = 2
    input_size = 4
    hidden_size = 32
    output_size = 1
    batch = 2
    seq = 8

    key = jax.random.PRNGKey(0)
    key, kx, kp = jax.random.split(key, 3)
    x = jax.random.normal(kx, (batch, seq, input_size), jnp.float32)
    params = init_params(kp, num_layers, input_size, hidden_size, output_size)

    out = rnn_forward(x, params,
                      num_layers=num_layers,
                      hidden_size=hidden_size,
                      output_size=output_size)
    out = jax.block_until_ready(out)
    assert out.shape == (batch, output_size)
    assert bool(jnp.all(jnp.isfinite(out)))
    print("KERNEL_OK")
</pallas_src>

<mosaic_0001>
module attributes {stable_mosaic.version = 11 : i64} {
  func.func @kernel(%arg0: i32, %arg1: memref<1x64x4xf32, #tpu.memory_space<vmem>>, %arg2: memref<4x128xf32, #tpu.memory_space<vmem>>, %arg3: memref<32x128xf32, #tpu.memory_space<vmem>>, %arg4: memref<1x128xf32, #tpu.memory_space<vmem>>, %arg5: memref<32x128xf32, #tpu.memory_space<vmem>>, %arg6: memref<32x128xf32, #tpu.memory_space<vmem>>, %arg7: memref<1x128xf32, #tpu.memory_space<vmem>>, %arg8: memref<32x1xf32, #tpu.memory_space<vmem>>, %arg9: memref<1x1xf32, #tpu.memory_space<vmem>>, %arg10: memref<1x8x1xf32, #tpu.memory_space<vmem>>, %arg11: memref<64x32xf32, #tpu.memory_space<vmem>>, %arg12: memref<64x128xf32, #tpu.memory_space<vmem>>) attributes {dimension_semantics = [#tpu.dimension_semantics<parallel>], iteration_bounds = array<i64: 1>, scalar_prefetch = 0 : i64, scratch_operands = 2 : i64, tpu.core_type = #tpu.core_type<tc>, window_params = [{transform_indices = @transform_0, window_bounds = array<i64: 1, 64, 4>}, {pipeline_mode = #tpu.pipeline_mode<synchronous>, transform_indices = @transform_1, window_bounds = array<i64: 4, 128>}, {pipeline_mode = #tpu.pipeline_mode<synchronous>, transform_indices = @transform_2, window_bounds = array<i64: 32, 128>}, {pipeline_mode = #tpu.pipeline_mode<synchronous>, transform_indices = @transform_3, window_bounds = array<i64: 1, 128>}, {pipeline_mode = #tpu.pipeline_mode<synchronous>, transform_indices = @transform_4, window_bounds = array<i64: 32, 128>}, {pipeline_mode = #tpu.pipeline_mode<synchronous>, transform_indices = @transform_5, window_bounds = array<i64: 32, 128>}, {pipeline_mode = #tpu.pipeline_mode<synchronous>, transform_indices = @transform_6, window_bounds = array<i64: 1, 128>}, {pipeline_mode = #tpu.pipeline_mode<synchronous>, transform_indices = @transform_7, window_bounds = array<i64: 32, 1>}, {pipeline_mode = #tpu.pipeline_mode<synchronous>, transform_indices = @transform_8, window_bounds = array<i64: 1, 1>}, {transform_indices = @transform_9, window_bounds = array<i64: 1, 8, 1>}]} {
    %0 = tpu.iota {dimensions = array<i32: 1>} : vector<1x128xi32>
    %c64_i32 = arith.constant 64 : i32
    %1 = vector.broadcast %c64_i32 : i32 to vector<1x128xi32>
    %2 = arith.cmpi sge, %0, %1 : vector<1x128xi32>
    %c96_i32 = arith.constant 96 : i32
    %3 = vector.broadcast %c96_i32 : i32 to vector<1x128xi32>
    %4 = arith.cmpi slt, %0, %3 : vector<1x128xi32>
    %5 = arith.andi %2, %4 : vector<1x128xi1>
    %cst = arith.constant 1.000000e+00 : f32
    %cst_0 = arith.constant 5.000000e-01 : f32
    %6 = vector.broadcast %cst : f32 to vector<1x128xf32>
    %7 = vector.broadcast %cst_0 : f32 to vector<1x128xf32>
    %8 = arith.select %5, %6, %7 : vector<1x128xi1>, vector<1x128xf32>
    %cst_1 = arith.constant 0.000000e+00 : f32
    %cst_2 = arith.constant 5.000000e-01 : f32
    %9 = vector.broadcast %cst_1 : f32 to vector<1x128xf32>
    %10 = vector.broadcast %cst_2 : f32 to vector<1x128xf32>
    %11 = arith.select %5, %9, %10 : vector<1x128xi1>, vector<1x128xf32>
    %c0 = arith.constant 0 : index
    %c0_3 = arith.constant 0 : index
    %12 = vector.load %arg2[%c0, %c0_3] : memref<4x128xf32, #tpu.memory_space<vmem>>, vector<4x128xf32>
    %c0_4 = arith.constant 0 : index
    %c0_5 = arith.constant 0 : index
    %13 = vector.load %arg3[%c0_4, %c0_5] : memref<32x128xf32, #tpu.memory_space<vmem>>, vector<32x128xf32>
    %14 = arith.truncf %13 : vector<32x128xf32> to vector<32x128xbf16>
    %c0_6 = arith.constant 0 : index
    %c0_7 = arith.constant 0 : index
    %15 = vector.load %arg4[%c0_6, %c0_7] : memref<1x128xf32, #tpu.memory_space<vmem>>, vector<1x128xf32>
    %c0_8 = arith.constant 0 : index
    %c0_9 = arith.constant 0 : index
    %c0_10 = arith.constant 0 : index
    %16 = vector.load %arg1[%c0_8, %c0_9, %c0_10] : memref<1x64x4xf32, #tpu.memory_space<vmem>>, vector<1x64x4xf32>
    %17 = vector.shape_cast %16 : vector<1x64x4xf32> to vector<64x4xf32>
    %cst_11 = arith.constant dense<0.000000e+00> : vector<64x128xf32>
    %18 = tpu.matmul %17, %12, %cst_11 {dimension_numbers = #tpu.dot_dimension_numbers<[1], [0], [0], [1], [0, 0, 1, 1], [], []>} : vector<64x4xf32>, vector<4x128xf32>, vector<64x128xf32> -> vector<64x128xf32>
    %19 = vector.broadcast %15 : vector<1x128xf32> to vector<64x128xf32>
    %20 = arith.addf %18, %19 : vector<64x128xf32>
    %c0_12 = arith.constant 0 : index
    %c0_13 = arith.constant 0 : index
    %21 = vector.load %arg12[%c0_12, %c0_13] : memref<64x128xf32, #tpu.memory_space<vmem>>, vector<64x128xf32>
    tpu.vector_store %arg12[%c0_12, %c0_13], %20 {strides = array<i32>} : memref<64x128xf32, #tpu.memory_space<vmem>>, vector<64x128xf32>,
    %cst_14 = arith.constant 0.000000e+00 : f32
    %22 = vector.broadcast %cst_14 : f32 to vector<8x32xf32>
    %cst_15 = arith.constant 0.000000e+00 : f32
    %23 = vector.broadcast %cst_15 : f32 to vector<8x32xf32>
    %c0_i32 = arith.constant 0 : i32
    %c8_i32 = arith.constant 8 : i32
    %24 = arith.muli %c0_i32, %c8_i32 : i32
    %25 = tpu.assume_multiple %24, 8 : i32
    %26 = arith.index_cast %25 : i32 to index
    %c0_16 = arith.constant 0 : index
    %27 = vector.load %arg12[%26, %c0_16] : memref<64x128xf32, #tpu.memory_space<vmem>>, vector<8x128xf32>
    %28 = arith.truncf %22 : vector<8x32xf32> to vector<8x32xbf16>
    %cst_17 = arith.constant dense<0.000000e+00> : vector<8x128xf32>
    %29 = tpu.matmul %28, %14, %cst_17 {dimension_numbers = #tpu.dot_dimension_numbers<[1], [0], [0], [1], [0, 0, 1, 1], [], []>} : vector<8x32xbf16>, vector<32x128xbf16>, vector<8x128xf32> -> vector<8x128xf32>
    %30 = arith.addf %27, %29 : vector<8x128xf32>
    %31 = math.tanh %30 : vector<8x128xf32>
    %32 = vector.broadcast %8 : vector<1x128xf32> to vector<8x128xf32>
    %33 = arith.mulf %31, %32 : vector<8x128xf32>
    %34 = vector.broadcast %11 : vector<1x128xf32> to vector<8x128xf32>
    %35 = arith.addf %33, %34 : vector<8x128xf32>
    %36 = vector.extract_strided_slice %35 {offsets = [0, 0], sizes = [8, 32], strides = [1, 1]} : vector<8x128xf32> to vector<8x32xf32>
    %37 = vector.extract_strided_slice %35 {offsets = [0, 32], sizes = [8, 32], strides = [1, 1]} : vector<8x128xf32> to vector<8x32xf32>
    %38 = vector.extract_strided_slice %35 {offsets = [0, 64], sizes = [8, 32], strides = [1, 1]} : vector<8x128xf32> to vector<8x32xf32>
    %39 = vector.extract_strided_slice %35 {offsets = [0, 96], sizes = [8, 32], strides = [1, 1]} : vector<8x128xf32> to vector<8x32xf32>
    %40 = arith.mulf %37, %23 : vector<8x32xf32>
    %41 = arith.mulf %36, %38 : vector<8x32xf32>
    %42 = arith.addf %40, %41 : vector<8x32xf32>
    %43 = math.tanh %42 : vector<8x32xf32>
    %44 = arith.mulf %39, %43 : vector<8x32xf32>
    %45 = arith.index_cast %25 : i32 to index
    %c0_18 = arith.constant 0 : index
    %46 = vector.load %arg11[%45, %c0_18] : memref<64x32xf32, #tpu.memory_space<vmem>>, vector<8x32xf32>
    tpu.vector_store %arg11[%45, %c0_18], %44 {strides = array<i32>} : memref<64x32xf32, #tpu.memory_space<vmem>>, vector<8x32xf32>,
    %c1_i32 = arith.constant 1 : i32
    %c8_i32_19 = arith.constant 8 : i32
    %47 = arith.muli %c1_i32, %c8_i32_19 : i32
    %48 = tpu.assume_multiple %47, 8 : i32
    %49 = arith.index_cast %48 : i32 to index
    %c0_20 = arith.constant 0 : index
    %50 = vector.load %arg12[%49, %c0_20] : memref<64x128xf32, #tpu.memory_space<vmem>>, vector<8x128xf32>
    %51 = arith.truncf %44 : vector<8x32xf32> to vector<8x32xbf16>
    %cst_21 = arith.constant dense<0.000000e+00> : vector<8x128xf32>
    %52 = tpu.matmul %51, %14, %cst_21 {dimension_numbers = #tpu.dot_dimension_numbers<[1], [0], [0], [1], [0, 0, 1, 1], [], []>} : vector<8x32xbf16>, vector<32x128xbf16>, vector<8x128xf32> -> vector<8x128xf32>
    %53 = arith.addf %50, %52 : vector<8x128xf32>
    %54 = math.tanh %53 : vector<8x128xf32>
    %55 = vector.broadcast %8 : vector<1x128xf32> to vector<8x128xf32>
    %56 = arith.mulf %54, %55 : vector<8x128xf32>
    %57 = vector.broadcast %11 : vector<1x128xf32> to vector<8x128xf32>
    %58 = arith.addf %56, %57 : vector<8x128xf32>
    %59 = vector.extract_strided_slice %58 {offsets = [0, 0], sizes = [8, 32], strides = [1, 1]} : vector<8x128xf32> to vector<8x32xf32>
    %60 = vector.extract_strided_slice %58 {offsets = [0, 32], sizes = [8, 32], strides = [1, 1]} : vector<8x128xf32> to vector<8x32xf32>
    %61 = vector.extract_strided_slice %58 {offsets = [0, 64], sizes = [8, 32], strides = [1, 1]} : vector<8x128xf32> to vector<8x32xf32>
    %62 = vector.extract_strided_slice %58 {offsets = [0, 96], sizes = [8, 32], strides = [1, 1]} : vector<8x128xf32> to vector<8x32xf32>
    %63 = arith.mulf %60, %42 : vector<8x32xf32>
    %64 = arith.mulf %59, %61 : vector<8x32xf32>
    %65 = arith.addf %63, %64 : vector<8x32xf32>
    %66 = math.tanh %65 : vector<8x32xf32>
    %67 = arith.mulf %62, %66 : vector<8x32xf32>
    %68 = arith.index_cast %48 : i32 to index
    %c0_22 = arith.constant 0 : index
    %69 = vector.load %arg11[%68, %c0_22] : memref<64x32xf32, #tpu.memory_space<vmem>>, vector<8x32xf32>
    tpu.vector_store %arg11[%68, %c0_22], %67 {strides = array<i32>} : memref<64x32xf32, #tpu.memory_space<vmem>>, vector<8x32xf32>,
    %c2_i32 = arith.constant 2 : i32
    %c8_i32_23 = arith.constant 8 : i32
    %70 = arith.muli %c2_i32, %c8_i32_23 : i32
    %71 = tpu.assume_multiple %70, 8 : i32
    %72 = arith.index_cast %71 : i32 to index
    %c0_24 = arith.constant 0 : index
    %73 = vector.load %arg12[%72, %c0_24] : memref<64x128xf32, #tpu.memory_space<vmem>>, vector<8x128xf32>
    %74 = arith.truncf %67 : vector<8x32xf32> to vector<8x32xbf16>
    %cst_25 = arith.constant dense<0.000000e+00> : vector<8x128xf32>
    %75 = tpu.matmul %74, %14, %cst_25 {dimension_numbers = #tpu.dot_dimension_numbers<[1], [0], [0], [1], [0, 0, 1, 1], [], []>} : vector<8x32xbf16>, vector<32x128xbf16>, vector<8x128xf32> -> vector<8x128xf32>
    %76 = arith.addf %73, %75 : vector<8x128xf32>
    %77 = math.tanh %76 : vector<8x128xf32>
    %78 = vector.broadcast %8 : vector<1x128xf32> to vector<8x128xf32>
    %79 = arith.mulf %77, %78 : vector<8x128xf32>
    %80 = vector.broadcast %11 : vector<1x128xf32> to vector<8x128xf32>
    %81 = arith.addf %79, %80 : vector<8x128xf32>
    %82 = vector.extract_strided_slice %81 {offsets = [0, 0], sizes = [8, 32], strides = [1, 1]} : vector<8x128xf32> to vector<8x32xf32>
    %83 = vector.extract_strided_slice %81 {offsets = [0, 32], sizes = [8, 32], strides = [1, 1]} : vector<8x128xf32> to vector<8x32xf32>
    %84 = vector.extract_strided_slice %81 {offsets = [0, 64], sizes = [8, 32], strides = [1, 1]} : vector<8x128xf32> to vector<8x32xf32>
    %85 = vector.extract_strided_slice %81 {offsets = [0, 96], sizes = [8, 32], strides = [1, 1]} : vector<8x128xf32> to vector<8x32xf32>
    %86 = arith.mulf %83, %65 : vector<8x32xf32>
    %87 = arith.mulf %82, %84 : vector<8x32xf32>
    %88 = arith.addf %86, %87 : vector<8x32xf32>
    %89 = math.tanh %88 : vector<8x32xf32>
    %90 = arith.mulf %85, %89 : vector<8x32xf32>
    %91 = arith.index_cast %71 : i32 to index
    %c0_26 = arith.constant 0 : index
    %92 = vector.load %arg11[%91, %c0_26] : memref<64x32xf32, #tpu.memory_space<vmem>>, vector<8x32xf32>
    tpu.vector_store %arg11[%91, %c0_26], %90 {strides = array<i32>} : memref<64x32xf32, #tpu.memory_space<vmem>>, vector<8x32xf32>,
    %c3_i32 = arith.constant 3 : i32
    %c8_i32_27 = arith.constant 8 : i32
    %93 = arith.muli %c3_i32, %c8_i32_27 : i32
    %94 = tpu.assume_multiple %93, 8 : i32
    %95 = arith.index_cast %94 : i32 to index
    %c0_28 = arith.constant 0 : index
    %96 = vector.load %arg12[%95, %c0_28] : memref<64x128xf32, #tpu.memory_space<vmem>>, vector<8x128xf32>
    %97 = arith.truncf %90 : vector<8x32xf32> to vector<8x32xbf16>
    %cst_29 = arith.constant dense<0.000000e+00> : vector<8x128xf32>
    %98 = tpu.matmul %97, %14, %cst_29 {dimension_numbers = #tpu.dot_dimension_numbers<[1], [0], [0], [1], [0, 0, 1, 1], [], []>} : vector<8x32xbf16>, vector<32x128xbf16>, vector<8x128xf32> -> vector<8x128xf32>
    %99 = arith.addf %96, %98 : vector<8x128xf32>
    %100 = math.tanh %99 : vector<8x128xf32>
    %101 = vector.broadcast %8 : vector<1x128xf32> to vector<8x128xf32>
    %102 = arith.mulf %100, %101 : vector<8x128xf32>
    %103 = vector.broadcast %11 : vector<1x128xf32> to vector<8x128xf32>
    %104 = arith.addf %102, %103 : vector<8x128xf32>
    %105 = vector.extract_strided_slice %104 {offsets = [0, 0], sizes = [8, 32], strides = [1, 1]} : vector<8x128xf32> to vector<8x32xf32>
    %106 = vector.extract_strided_slice %104 {offsets = [0, 32], sizes = [8, 32], strides = [1, 1]} : vector<8x128xf32> to vector<8x32xf32>
    %107 = vector.extract_strided_slice %104 {offsets = [0, 64], sizes = [8, 32], strides = [1, 1]} : vector<8x128xf32> to vector<8x32xf32>
    %108 = vector.extract_strided_slice %104 {offsets = [0, 96], sizes = [8, 32], strides = [1, 1]} : vector<8x128xf32> to vector<8x32xf32>
    %109 = arith.mulf %106, %88 : vector<8x32xf32>
    %110 = arith.mulf %105, %107 : vector<8x32xf32>
    %111 = arith.addf %109, %110 : vector<8x32xf32>
    %112 = math.tanh %111 : vector<8x32xf32>
    %113 = arith.mulf %108, %112 : vector<8x32xf32>
    %114 = arith.index_cast %94 : i32 to index
    %c0_30 = arith.constant 0 : index
    %115 = vector.load %arg11[%114, %c0_30] : memref<64x32xf32, #tpu.memory_space<vmem>>, vector<8x32xf32>
    tpu.vector_store %arg11[%114, %c0_30], %113 {strides = array<i32>} : memref<64x32xf32, #tpu.memory_space<vmem>>, vector<8x32xf32>,
    %c4_i32 = arith.constant 4 : i32
    %c8_i32_31 = arith.constant 8 : i32
    %116 = arith.muli %c4_i32, %c8_i32_31 : i32
    %117 = tpu.assume_multiple %116, 8 : i32
    %118 = arith.index_cast %117 : i32 to index
    %c0_32 = arith.constant 0 : index
    %119 = vector.load %arg12[%118, %c0_32] : memref<64x128xf32, #tpu.memory_space<vmem>>, vector<8x128xf32>
    %120 = arith.truncf %113 : vector<8x32xf32> to vector<8x32xbf16>
    %cst_33 = arith.constant dense<0.000000e+00> : vector<8x128xf32>
    %121 = tpu.matmul %120, %14, %cst_33 {dimension_numbers = #tpu.dot_dimension_numbers<[1], [0], [0], [1], [0, 0, 1, 1], [], []>} : vector<8x32xbf16>, vector<32x128xbf16>, vector<8x128xf32> -> vector<8x128xf32>
    %122 = arith.addf %119, %121 : vector<8x128xf32>
    %123 = math.tanh %122 : vector<8x128xf32>
    %124 = vector.broadcast %8 : vector<1x128xf32> to vector<8x128xf32>
    %125 = arith.mulf %123, %124 : vector<8x128xf32>
    %126 = vector.broadcast %11 : vector<1x128xf32> to vector<8x128xf32>
    %127 = arith.addf %125, %126 : vector<8x128xf32>
    %128 = vector.extract_strided_slice %127 {offsets = [0, 0], sizes = [8, 32], strides = [1, 1]} : vector<8x128xf32> to vector<8x32xf32>
    %129 = vector.extract_strided_slice %127 {offsets = [0, 32], sizes = [8, 32], strides = [1, 1]} : vector<8x128xf32> to vector<8x32xf32>
    %130 = vector.extract_strided_slice %127 {offsets = [0, 64], sizes = [8, 32], strides = [1, 1]} : vector<8x128xf32> to vector<8x32xf32>
    %131 = vector.extract_strided_slice %127 {offsets = [0, 96], sizes = [8, 32], strides = [1, 1]} : vector<8x128xf32> to vector<8x32xf32>
    %132 = arith.mulf %129, %111 : vector<8x32xf32>
    %133 = arith.mulf %128, %130 : vector<8x32xf32>
    %134 = arith.addf %132, %133 : vector<8x32xf32>
    %135 = math.tanh %134 : vector<8x32xf32>
    %136 = arith.mulf %131, %135 : vector<8x32xf32>
    %137 = arith.index_cast %117 : i32 to index
    %c0_34 = arith.constant 0 : index
    %138 = vector.load %arg11[%137, %c0_34] : memref<64x32xf32, #tpu.memory_space<vmem>>, vector<8x32xf32>
    tpu.vector_store %arg11[%137, %c0_34], %136 {strides = array<i32>} : memref<64x32xf32, #tpu.memory_space<vmem>>, vector<8x32xf32>,
    %c5_i32 = arith.constant 5 : i32
    %c8_i32_35 = arith.constant 8 : i32
    %139 = arith.muli %c5_i32, %c8_i32_35 : i32
    %140 = tpu.assume_multiple %139, 8 : i32
    %141 = arith.index_cast %140 : i32 to index
    %c0_36 = arith.constant 0 : index
    %142 = vector.load %arg12[%141, %c0_36] : memref<64x128xf32, #tpu.memory_space<vmem>>, vector<8x128xf32>
    %143 = arith.truncf %136 : vector<8x32xf32> to vector<8x32xbf16>
    %cst_37 = arith.constant dense<0.000000e+00> : vector<8x128xf32>
    %144 = tpu.matmul %143, %14, %cst_37 {dimension_numbers = #tpu.dot_dimension_numbers<[1], [0], [0], [1], [0, 0, 1, 1], [], []>} : vector<8x32xbf16>, vector<32x128xbf16>, vector<8x128xf32> -> vector<8x128xf32>
    %145 = arith.addf %142, %144 : vector<8x128xf32>
    %146 = math.tanh %145 : vector<8x128xf32>
    %147 = vector.broadcast %8 : vector<1x128xf32> to vector<8x128xf32>
    %148 = arith.mulf %146, %147 : vector<8x128xf32>
    %149 = vector.broadcast %11 : vector<1x128xf32> to vector<8x128xf32>
    %150 = arith.addf %148, %149 : vector<8x128xf32>
    %151 = vector.extract_strided_slice %150 {offsets = [0, 0], sizes = [8, 32], strides = [1, 1]} : vector<8x128xf32> to vector<8x32xf32>
    %152 = vector.extract_strided_slice %150 {offsets = [0, 32], sizes = [8, 32], strides = [1, 1]} : vector<8x128xf32> to vector<8x32xf32>
    %153 = vector.extract_strided_slice %150 {offsets = [0, 64], sizes = [8, 32], strides = [1, 1]} : vector<8x128xf32> to vector<8x32xf32>
    %154 = vector.extract_strided_slice %150 {offsets = [0, 96], sizes = [8, 32], strides = [1, 1]} : vector<8x128xf32> to vector<8x32xf32>
    %155 = arith.mulf %152, %134 : vector<8x32xf32>
    %156 = arith.mulf %151, %153 : vector<8x32xf32>
    %157 = arith.addf %155, %156 : vector<8x32xf32>
    %158 = math.tanh %157 : vector<8x32xf32>
    %159 = arith.mulf %154, %158 : vector<8x32xf32>
    %160 = arith.index_cast %140 : i32 to index
    %c0_38 = arith.constant 0 : index
    %161 = vector.load %arg11[%160, %c0_38] : memref<64x32xf32, #tpu.memory_space<vmem>>, vector<8x32xf32>
    tpu.vector_store %arg11[%160, %c0_38], %159 {strides = array<i32>} : memref<64x32xf32, #tpu.memory_space<vmem>>, vector<8x32xf32>,
    %c6_i32 = arith.constant 6 : i32
    %c8_i32_39 = arith.constant 8 : i32
    %162 = arith.muli %c6_i32, %c8_i32_39 : i32
    %163 = tpu.assume_multiple %162, 8 : i32
    %164 = arith.index_cast %163 : i32 to index
    %c0_40 = arith.constant 0 : index
    %165 = vector.load %arg12[%164, %c0_40] : memref<64x128xf32, #tpu.memory_space<vmem>>, vector<8x128xf32>
    %166 = arith.truncf %159 : vector<8x32xf32> to vector<8x32xbf16>
    %cst_41 = arith.constant dense<0.000000e+00> : vector<8x128xf32>
    %167 = tpu.matmul %166, %14, %cst_41 {dimension_numbers = #tpu.dot_dimension_numbers<[1], [0], [0], [1], [0, 0, 1, 1], [], []>} : vector<8x32xbf16>, vector<32x128xbf16>, vector<8x128xf32> -> vector<8x128xf32>
    %168 = arith.addf %165, %167 : vector<8x128xf32>
    %169 = math.tanh %168 : vector<8x128xf32>
    %170 = vector.broadcast %8 : vector<1x128xf32> to vector<8x128xf32>
    %171 = arith.mulf %169, %170 : vector<8x128xf32>
    %172 = vector.broadcast %11 : vector<1x128xf32> to vector<8x128xf32>
    %173 = arith.addf %171, %172 : vector<8x128xf32>
    %174 = vector.extract_strided_slice %173 {offsets = [0, 0], sizes = [8, 32], strides = [1, 1]} : vector<8x128xf32> to vector<8x32xf32>
    %175 = vector.extract_strided_slice %173 {offsets = [0, 32], sizes = [8, 32], strides = [1, 1]} : vector<8x128xf32> to vector<8x32xf32>
    %176 = vector.extract_strided_slice %173 {offsets = [0, 64], sizes = [8, 32], strides = [1, 1]} : vector<8x128xf32> to vector<8x32xf32>
    %177 = vector.extract_strided_slice %173 {offsets = [0, 96], sizes = [8, 32], strides = [1, 1]} : vector<8x128xf32> to vector<8x32xf32>
    %178 = arith.mulf %175, %157 : vector<8x32xf32>
    %179 = arith.mulf %174, %176 : vector<8x32xf32>
    %180 = arith.addf %178, %179 : vector<8x32xf32>
    %181 = math.tanh %180 : vector<8x32xf32>
    %182 = arith.mulf %177, %181 : vector<8x32xf32>
    %183 = arith.index_cast %163 : i32 to index
    %c0_42 = arith.constant 0 : index
    %184 = vector.load %arg11[%183, %c0_42] : memref<64x32xf32, #tpu.memory_space<vmem>>, vector<8x32xf32>
    tpu.vector_store %arg11[%183, %c0_42], %182 {strides = array<i32>} : memref<64x32xf32, #tpu.memory_space<vmem>>, vector<8x32xf32>,
    %c7_i32 = arith.constant 7 : i32
    %c8_i32_43 = arith.constant 8 : i32
    %185 = arith.muli %c7_i32, %c8_i32_43 : i32
    %186 = tpu.assume_multiple %185, 8 : i32
    %187 = arith.index_cast %186 : i32 to index
    %c0_44 = arith.constant 0 : index
    %188 = vector.load %arg12[%187, %c0_44] : memref<64x128xf32, #tpu.memory_space<vmem>>, vector<8x128xf32>
    %189 = arith.truncf %182 : vector<8x32xf32> to vector<8x32xbf16>
    %cst_45 = arith.constant dense<0.000000e+00> : vector<8x128xf32>
    %190 = tpu.matmul %189, %14, %cst_45 {dimension_numbers = #tpu.dot_dimension_numbers<[1], [0], [0], [1], [0, 0, 1, 1], [], []>} : vector<8x32xbf16>, vector<32x128xbf16>, vector<8x128xf32> -> vector<8x128xf32>
    %191 = arith.addf %188, %190 : vector<8x128xf32>
    %192 = math.tanh %191 : vector<8x128xf32>
    %193 = vector.broadcast %8 : vector<1x128xf32> to vector<8x128xf32>
    %194 = arith.mulf %192, %193 : vector<8x128xf32>
    %195 = vector.broadcast %11 : vector<1x128xf32> to vector<8x128xf32>
    %196 = arith.addf %194, %195 : vector<8x128xf32>
    %197 = vector.extract_strided_slice %196 {offsets = [0, 0], sizes = [8, 32], strides = [1, 1]} : vector<8x128xf32> to vector<8x32xf32>
    %198 = vector.extract_strided_slice %196 {offsets = [0, 32], sizes = [8, 32], strides = [1, 1]} : vector<8x128xf32> to vector<8x32xf32>
    %199 = vector.extract_strided_slice %196 {offsets = [0, 64], sizes = [8, 32], strides = [1, 1]} : vector<8x128xf32> to vector<8x32xf32>
    %200 = vector.extract_strided_slice %196 {offsets = [0, 96], sizes = [8, 32], strides = [1, 1]} : vector<8x128xf32> to vector<8x32xf32>
    %201 = arith.mulf %198, %180 : vector<8x32xf32>
    %202 = arith.mulf %197, %199 : vector<8x32xf32>
    %203 = arith.addf %201, %202 : vector<8x32xf32>
    %204 = math.tanh %203 : vector<8x32xf32>
    %205 = arith.mulf %200, %204 : vector<8x32xf32>
    %206 = arith.index_cast %186 : i32 to index
    %c0_46 = arith.constant 0 : index
    %207 = vector.load %arg11[%206, %c0_46] : memref<64x32xf32, #tpu.memory_space<vmem>>, vector<8x32xf32>
    tpu.vector_store %arg11[%206, %c0_46], %205 {strides = array<i32>} : memref<64x32xf32, #tpu.memory_space<vmem>>, vector<8x32xf32>,
    %c8_i32_47 = arith.constant 8 : i32
    %c0_48 = arith.constant 0 : index
    %c0_49 = arith.constant 0 : index
    %208 = vector.load %arg5[%c0_48, %c0_49] : memref<32x128xf32, #tpu.memory_space<vmem>>, vector<32x128xf32>
    %c0_50 = arith.constant 0 : index
    %c0_51 = arith.constant 0 : index
    %209 = vector.load %arg6[%c0_50, %c0_51] : memref<32x128xf32, #tpu.memory_space<vmem>>, vector<32x128xf32>
    %210 = arith.truncf %209 : vector<32x128xf32> to vector<32x128xbf16>
    %c0_52 = arith.constant 0 : index
    %c0_53 = arith.constant 0 : index
    %211 = vector.load %arg7[%c0_52, %c0_53] : memref<1x128xf32, #tpu.memory_space<vmem>>, vector<1x128xf32>
    %c0_54 = arith.constant 0 : index
    %c0_55 = arith.constant 0 : index
    %212 = vector.load %arg11[%c0_54, %c0_55] : memref<64x32xf32, #tpu.memory_space<vmem>>, vector<64x32xf32>
    %cst_56 = arith.constant dense<0.000000e+00> : vector<64x128xf32>
    %213 = tpu.matmul %212, %208, %cst_56 {dimension_numbers = #tpu.dot_dimension_numbers<[1], [0], [0], [1], [0, 0, 1, 1], [], []>} : vector<64x32xf32>, vector<32x128xf32>, vector<64x128xf32> -> vector<64x128xf32>
    %214 = vector.broadcast %211 : vector<1x128xf32> to vector<64x128xf32>
    %215 = arith.addf %213, %214 : vector<64x128xf32>
    %c0_57 = arith.constant 0 : index
    %c0_58 = arith.constant 0 : index
    %216 = vector.load %arg12[%c0_57, %c0_58] : memref<64x128xf32, #tpu.memory_space<vmem>>, vector<64x128xf32>
    tpu.vector_store %arg12[%c0_57, %c0_58], %215 {strides = array<i32>} : memref<64x128xf32, #tpu.memory_space<vmem>>, vector<64x128xf32>,
    %cst_59 = arith.constant 0.000000e+00 : f32
    %217 = vector.broadcast %cst_59 : f32 to vector<8x32xf32>
    %cst_60 = arith.constant 0.000000e+00 : f32
    %218 = vector.broadcast %cst_60 : f32 to vector<8x32xf32>
    %c0_i32_61 = arith.constant 0 : i32
    %c8_i32_62 = arith.constant 8 : i32
    %219 = arith.muli %c0_i32_61, %c8_i32_62 : i32
    %220 = tpu.assume_multiple %219, 8 : i32
    %221 = arith.index_cast %220 : i32 to index
    %c0_63 = arith.constant 0 : index
    %222 = vector.load %arg12[%221, %c0_63] : memref<64x128xf32, #tpu.memory_space<vmem>>, vector<8x128xf32>
    %223 = arith.truncf %217 : vector<8x32xf32> to vector<8x32xbf16>
    %cst_64 = arith.constant dense<0.000000e+00> : vector<8x128xf32>
    %224 = tpu.matmul %223, %210, %cst_64 {dimension_numbers = #tpu.dot_dimension_numbers<[1], [0], [0], [1], [0, 0, 1, 1], [], []>} : vector<8x32xbf16>, vector<32x128xbf16>, vector<8x128xf32> -> vector<8x128xf32>
    %225 = arith.addf %222, %224 : vector<8x128xf32>
    %226 = math.tanh %225 : vector<8x128xf32>
    %227 = vector.broadcast %8 : vector<1x128xf32> to vector<8x128xf32>
    %228 = arith.mulf %226, %227 : vector<8x128xf32>
    %229 = vector.broadcast %11 : vector<1x128xf32> to vector<8x128xf32>
    %230 = arith.addf %228, %229 : vector<8x128xf32>
    %231 = vector.extract_strided_slice %230 {offsets = [0, 0], sizes = [8, 32], strides = [1, 1]} : vector<8x128xf32> to vector<8x32xf32>
    %232 = vector.extract_strided_slice %230 {offsets = [0, 32], sizes = [8, 32], strides = [1, 1]} : vector<8x128xf32> to vector<8x32xf32>
    %233 = vector.extract_strided_slice %230 {offsets = [0, 64], sizes = [8, 32], strides = [1, 1]} : vector<8x128xf32> to vector<8x32xf32>
    %234 = vector.extract_strided_slice %230 {offsets = [0, 96], sizes = [8, 32], strides = [1, 1]} : vector<8x128xf32> to vector<8x32xf32>
    %235 = arith.mulf %232, %218 : vector<8x32xf32>
    %236 = arith.mulf %231, %233 : vector<8x32xf32>
    %237 = arith.addf %235, %236 : vector<8x32xf32>
    %238 = math.tanh %237 : vector<8x32xf32>
    %239 = arith.mulf %234, %238 : vector<8x32xf32>
    %240 = arith.index_cast %220 : i32 to index
    %c0_65 = arith.constant 0 : index
    %241 = vector.load %arg11[%240, %c0_65] : memref<64x32xf32, #tpu.memory_space<vmem>>, vector<8x32xf32>
    tpu.vector_store %arg11[%240, %c0_65], %239 {strides = array<i32>} : memref<64x32xf32, #tpu.memory_space<vmem>>, vector<8x32xf32>,
    %c1_i32_66 = arith.constant 1 : i32
    %c8_i32_67 = arith.constant 8 : i32
    %242 = arith.muli %c1_i32_66, %c8_i32_67 : i32
    %243 = tpu.assume_multiple %242, 8 : i32
    %244 = arith.index_cast %243 : i32 to index
    %c0_68 = arith.constant 0 : index
    %245 = vector.load %arg12[%244, %c0_68] : memref<64x128xf32, #tpu.memory_space<vmem>>, vector<8x128xf32>
    %246 = arith.truncf %239 : vector<8x32xf32> to vector<8x32xbf16>
    %cst_69 = arith.constant dense<0.000000e+00> : vector<8x128xf32>
    %247 = tpu.matmul %246, %210, %cst_69 {dimension_numbers = #tpu.dot_dimension_numbers<[1], [0], [0], [1], [0, 0, 1, 1], [], []>} : vector<8x32xbf16>, vector<32x128xbf16>, vector<8x128xf32> -> vector<8x128xf32>
    %248 = arith.addf %245, %247 : vector<8x128xf32>
    %249 = math.tanh %248 : vector<8x128xf32>
    %250 = vector.broadcast %8 : vector<1x128xf32> to vector<8x128xf32>
    %251 = arith.mulf %249, %250 : vector<8x128xf32>
    %252 = vector.broadcast %11 : vector<1x128xf32> to vector<8x128xf32>
    %253 = arith.addf %251, %252 : vector<8x128xf32>
    %254 = vector.extract_strided_slice %253 {offsets = [0, 0], sizes = [8, 32], strides = [1, 1]} : vector<8x128xf32> to vector<8x32xf32>
    %255 = vector.extract_strided_slice %253 {offsets = [0, 32], sizes = [8, 32], strides = [1, 1]} : vector<8x128xf32> to vector<8x32xf32>
    %256 = vector.extract_strided_slice %253 {offsets = [0, 64], sizes = [8, 32], strides = [1, 1]} : vector<8x128xf32> to vector<8x32xf32>
    %257 = vector.extract_strided_slice %253 {offsets = [0, 96], sizes = [8, 32], strides = [1, 1]} : vector<8x128xf32> to vector<8x32xf32>
    %258 = arith.mulf %255, %237 : vector<8x32xf32>
    %259 = arith.mulf %254, %256 : vector<8x32xf32>
    %260 = arith.addf %258, %259 : vector<8x32xf32>
    %261 = math.tanh %260 : vector<8x32xf32>
    %262 = arith.mulf %257, %261 : vector<8x32xf32>
    %263 = arith.index_cast %243 : i32 to index
    %c0_70 = arith.constant 0 : index
    %264 = vector.load %arg11[%263, %c0_70] : memref<64x32xf32, #tpu.memory_space<vmem>>, vector<8x32xf32>
    tpu.vector_store %arg11[%263, %c0_70], %262 {strides = array<i32>} : memref<64x32xf32, #tpu.memory_space<vmem>>, vector<8x32xf32>,
    %c2_i32_71 = arith.constant 2 : i32
    %c8_i32_72 = arith.constant 8 : i32
    %265 = arith.muli %c2_i32_71, %c8_i32_72 : i32
    %266 = tpu.assume_multiple %265, 8 : i32
    %267 = arith.index_cast %266 : i32 to index
    %c0_73 = arith.constant 0 : index
    %268 = vector.load %arg12[%267, %c0_73] : memref<64x128xf32, #tpu.memory_space<vmem>>, vector<8x128xf32>
    %269 = arith.truncf %262 : vector<8x32xf32> to vector<8x32xbf16>
    %cst_74 = arith.constant dense<0.000000e+00> : vector<8x128xf32>
    %270 = tpu.matmul %269, %210, %cst_74 {dimension_numbers = #tpu.dot_dimension_numbers<[1], [0], [0], [1], [0, 0, 1, 1], [], []>} : vector<8x32xbf16>, vector<32x128xbf16>, vector<8x128xf32> -> vector<8x128xf32>
    %271 = arith.addf %268, %270 : vector<8x128xf32>
    %272 = math.tanh %271 : vector<8x128xf32>
    %273 = vector.broadcast %8 : vector<1x128xf32> to vector<8x128xf32>
    %274 = arith.mulf %272, %273 : vector<8x128xf32>
    %275 = vector.broadcast %11 : vector<1x128xf32> to vector<8x128xf32>
    %276 = arith.addf %274, %275 : vector<8x128xf32>
    %277 = vector.extract_strided_slice %276 {offsets = [0, 0], sizes = [8, 32], strides = [1, 1]} : vector<8x128xf32> to vector<8x32xf32>
    %278 = vector.extract_strided_slice %276 {offsets = [0, 32], sizes = [8, 32], strides = [1, 1]} : vector<8x128xf32> to vector<8x32xf32>
    %279 = vector.extract_strided_slice %276 {offsets = [0, 64], sizes = [8, 32], strides = [1, 1]} : vector<8x128xf32> to vector<8x32xf32>
    %280 = vector.extract_strided_slice %276 {offsets = [0, 96], sizes = [8, 32], strides = [1, 1]} : vector<8x128xf32> to vector<8x32xf32>
    %281 = arith.mulf %278, %260 : vector<8x32xf32>
    %282 = arith.mulf %277, %279 : vector<8x32xf32>
    %283 = arith.addf %281, %282 : vector<8x32xf32>
    %284 = math.tanh %283 : vector<8x32xf32>
    %285 = arith.mulf %280, %284 : vector<8x32xf32>
    %286 = arith.index_cast %266 : i32 to index
    %c0_75 = arith.constant 0 : index
    %287 = vector.load %arg11[%286, %c0_75] : memref<64x32xf32, #tpu.memory_space<vmem>>, vector<8x32xf32>
    tpu.vector_store %arg11[%286, %c0_75], %285 {strides = array<i32>} : memref<64x32xf32, #tpu.memory_space<vmem>>, vector<8x32xf32>,
    %c3_i32_76 = arith.constant 3 : i32
    %c8_i32_77 = arith.constant 8 : i32
    %288 = arith.muli %c3_i32_76, %c8_i32_77 : i32
    %289 = tpu.assume_multiple %288, 8 : i32
    %290 = arith.index_cast %289 : i32 to index
    %c0_78 = arith.constant 0 : index
    %291 = vector.load %arg12[%290, %c0_78] : memref<64x128xf32, #tpu.memory_space<vmem>>, vector<8x128xf32>
    %292 = arith.truncf %285 : vector<8x32xf32> to vector<8x32xbf16>
    %cst_79 = arith.constant dense<0.000000e+00> : vector<8x128xf32>
    %293 = tpu.matmul %292, %210, %cst_79 {dimension_numbers = #tpu.dot_dimension_numbers<[1], [0], [0], [1], [0, 0, 1, 1], [], []>} : vector<8x32xbf16>, vector<32x128xbf16>, vector<8x128xf32> -> vector<8x128xf32>
    %294 = arith.addf %291, %293 : vector<8x128xf32>
    %295 = math.tanh %294 : vector<8x128xf32>
    %296 = vector.broadcast %8 : vector<1x128xf32> to vector<8x128xf32>
    %297 = arith.mulf %295, %296 : vector<8x128xf32>
    %298 = vector.broadcast %11 : vector<1x128xf32> to vector<8x128xf32>
    %299 = arith.addf %297, %298 : vector<8x128xf32>
    %300 = vector.extract_strided_slice %299 {offsets = [0, 0], sizes = [8, 32], strides = [1, 1]} : vector<8x128xf32> to vector<8x32xf32>
    %301 = vector.extract_strided_slice %299 {offsets = [0, 32], sizes = [8, 32], strides = [1, 1]} : vector<8x128xf32> to vector<8x32xf32>
    %302 = vector.extract_strided_slice %299 {offsets = [0, 64], sizes = [8, 32], strides = [1, 1]} : vector<8x128xf32> to vector<8x32xf32>
    %303 = vector.extract_strided_slice %299 {offsets = [0, 96], sizes = [8, 32], strides = [1, 1]} : vector<8x128xf32> to vector<8x32xf32>
    %304 = arith.mulf %301, %283 : vector<8x32xf32>
    %305 = arith.mulf %300, %302 : vector<8x32xf32>
    %306 = arith.addf %304, %305 : vector<8x32xf32>
    %307 = math.tanh %306 : vector<8x32xf32>
    %308 = arith.mulf %303, %307 : vector<8x32xf32>
    %309 = arith.index_cast %289 : i32 to index
    %c0_80 = arith.constant 0 : index
    %310 = vector.load %arg11[%309, %c0_80] : memref<64x32xf32, #tpu.memory_space<vmem>>, vector<8x32xf32>
    tpu.vector_store %arg11[%309, %c0_80], %308 {strides = array<i32>} : memref<64x32xf32, #tpu.memory_space<vmem>>, vector<8x32xf32>,
    %c4_i32_81 = arith.constant 4 : i32
    %c8_i32_82 = arith.constant 8 : i32
    %311 = arith.muli %c4_i32_81, %c8_i32_82 : i32
    %312 = tpu.assume_multiple %311, 8 : i32
    %313 = arith.index_cast %312 : i32 to index
    %c0_83 = arith.constant 0 : index
    %314 = vector.load %arg12[%313, %c0_83] : memref<64x128xf32, #tpu.memory_space<vmem>>, vector<8x128xf32>
    %315 = arith.truncf %308 : vector<8x32xf32> to vector<8x32xbf16>
    %cst_84 = arith.constant dense<0.000000e+00> : vector<8x128xf32>
    %316 = tpu.matmul %315, %210, %cst_84 {dimension_numbers = #tpu.dot_dimension_numbers<[1], [0], [0], [1], [0, 0, 1, 1], [], []>} : vector<8x32xbf16>, vector<32x128xbf16>, vector<8x128xf32> -> vector<8x128xf32>
    %317 = arith.addf %314, %316 : vector<8x128xf32>
    %318 = math.tanh %317 : vector<8x128xf32>
    %319 = vector.broadcast %8 : vector<1x128xf32> to vector<8x128xf32>
    %320 = arith.mulf %318, %319 : vector<8x128xf32>
    %321 = vector.broadcast %11 : vector<1x128xf32> to vector<8x128xf32>
    %322 = arith.addf %320, %321 : vector<8x128xf32>
    %323 = vector.extract_strided_slice %322 {offsets = [0, 0], sizes = [8, 32], strides = [1, 1]} : vector<8x128xf32> to vector<8x32xf32>
    %324 = vector.extract_strided_slice %322 {offsets = [0, 32], sizes = [8, 32], strides = [1, 1]} : vector<8x128xf32> to vector<8x32xf32>
    %325 = vector.extract_strided_slice %322 {offsets = [0, 64], sizes = [8, 32], strides = [1, 1]} : vector<8x128xf32> to vector<8x32xf32>
    %326 = vector.extract_strided_slice %322 {offsets = [0, 96], sizes = [8, 32], strides = [1, 1]} : vector<8x128xf32> to vector<8x32xf32>
    %327 = arith.mulf %324, %306 : vector<8x32xf32>
    %328 = arith.mulf %323, %325 : vector<8x32xf32>
    %329 = arith.addf %327, %328 : vector<8x32xf32>
    %330 = math.tanh %329 : vector<8x32xf32>
    %331 = arith.mulf %326, %330 : vector<8x32xf32>
    %332 = arith.index_cast %312 : i32 to index
    %c0_85 = arith.constant 0 : index
    %333 = vector.load %arg11[%332, %c0_85] : memref<64x32xf32, #tpu.memory_space<vmem>>, vector<8x32xf32>
    tpu.vector_store %arg11[%332, %c0_85], %331 {strides = array<i32>} : memref<64x32xf32, #tpu.memory_space<vmem>>, vector<8x32xf32>,
    %c5_i32_86 = arith.constant 5 : i32
    %c8_i32_87 = arith.constant 8 : i32
    %334 = arith.muli %c5_i32_86, %c8_i32_87 : i32
    %335 = tpu.assume_multiple %334, 8 : i32
    %336 = arith.index_cast %335 : i32 to index
    %c0_88 = arith.constant 0 : index
    %337 = vector.load %arg12[%336, %c0_88] : memref<64x128xf32, #tpu.memory_space<vmem>>, vector<8x128xf32>
    %338 = arith.truncf %331 : vector<8x32xf32> to vector<8x32xbf16>
    %cst_89 = arith.constant dense<0.000000e+00> : vector<8x128xf32>
    %339 = tpu.matmul %338, %210, %cst_89 {dimension_numbers = #tpu.dot_dimension_numbers<[1], [0], [0], [1], [0, 0, 1, 1], [], []>} : vector<8x32xbf16>, vector<32x128xbf16>, vector<8x128xf32> -> vector<8x128xf32>
    %340 = arith.addf %337, %339 : vector<8x128xf32>
    %341 = math.tanh %340 : vector<8x128xf32>
    %342 = vector.broadcast %8 : vector<1x128xf32> to vector<8x128xf32>
    %343 = arith.mulf %341, %342 : vector<8x128xf32>
    %344 = vector.broadcast %11 : vector<1x128xf32> to vector<8x128xf32>
    %345 = arith.addf %343, %344 : vector<8x128xf32>
    %346 = vector.extract_strided_slice %345 {offsets = [0, 0], sizes = [8, 32], strides = [1, 1]} : vector<8x128xf32> to vector<8x32xf32>
    %347 = vector.extract_strided_slice %345 {offsets = [0, 32], sizes = [8, 32], strides = [1, 1]} : vector<8x128xf32> to vector<8x32xf32>
    %348 = vector.extract_strided_slice %345 {offsets = [0, 64], sizes = [8, 32], strides = [1, 1]} : vector<8x128xf32> to vector<8x32xf32>
    %349 = vector.extract_strided_slice %345 {offsets = [0, 96], sizes = [8, 32], strides = [1, 1]} : vector<8x128xf32> to vector<8x32xf32>
    %350 = arith.mulf %347, %329 : vector<8x32xf32>
    %351 = arith.mulf %346, %348 : vector<8x32xf32>
    %352 = arith.addf %350, %351 : vector<8x32xf32>
    %353 = math.tanh %352 : vector<8x32xf32>
    %354 = arith.mulf %349, %353 : vector<8x32xf32>
    %355 = arith.index_cast %335 : i32 to index
    %c0_90 = arith.constant 0 : index
    %356 = vector.load %arg11[%355, %c0_90] : memref<64x32xf32, #tpu.memory_space<vmem>>, vector<8x32xf32>
    tpu.vector_store %arg11[%355, %c0_90], %354 {strides = array<i32>} : memref<64x32xf32, #tpu.memory_space<vmem>>, vector<8x32xf32>,
    %c6_i32_91 = arith.constant 6 : i32
    %c8_i32_92 = arith.constant 8 : i32
    %357 = arith.muli %c6_i32_91, %c8_i32_92 : i32
    %358 = tpu.assume_multiple %357, 8 : i32
    %359 = arith.index_cast %358 : i32 to index
    %c0_93 = arith.constant 0 : index
    %360 = vector.load %arg12[%359, %c0_93] : memref<64x128xf32, #tpu.memory_space<vmem>>, vector<8x128xf32>
    %361 = arith.truncf %354 : vector<8x32xf32> to vector<8x32xbf16>
    %cst_94 = arith.constant dense<0.000000e+00> : vector<8x128xf32>
    %362 = tpu.matmul %361, %210, %cst_94 {dimension_numbers = #tpu.dot_dimension_numbers<[1], [0], [0], [1], [0, 0, 1, 1], [], []>} : vector<8x32xbf16>, vector<32x128xbf16>, vector<8x128xf32> -> vector<8x128xf32>
    %363 = arith.addf %360, %362 : vector<8x128xf32>
    %364 = math.tanh %363 : vector<8x128xf32>
    %365 = vector.broadcast %8 : vector<1x128xf32> to vector<8x128xf32>
    %366 = arith.mulf %364, %365 : vector<8x128xf32>
    %367 = vector.broadcast %11 : vector<1x128xf32> to vector<8x128xf32>
    %368 = arith.addf %366, %367 : vector<8x128xf32>
    %369 = vector.extract_strided_slice %368 {offsets = [0, 0], sizes = [8, 32], strides = [1, 1]} : vector<8x128xf32> to vector<8x32xf32>
    %370 = vector.extract_strided_slice %368 {offsets = [0, 32], sizes = [8, 32], strides = [1, 1]} : vector<8x128xf32> to vector<8x32xf32>
    %371 = vector.extract_strided_slice %368 {offsets = [0, 64], sizes = [8, 32], strides = [1, 1]} : vector<8x128xf32> to vector<8x32xf32>
    %372 = vector.extract_strided_slice %368 {offsets = [0, 96], sizes = [8, 32], strides = [1, 1]} : vector<8x128xf32> to vector<8x32xf32>
    %373 = arith.mulf %370, %352 : vector<8x32xf32>
    %374 = arith.mulf %369, %371 : vector<8x32xf32>
    %375 = arith.addf %373, %374 : vector<8x32xf32>
    %376 = math.tanh %375 : vector<8x32xf32>
    %377 = arith.mulf %372, %376 : vector<8x32xf32>
    %378 = arith.index_cast %358 : i32 to index
    %c0_95 = arith.constant 0 : index
    %379 = vector.load %arg11[%378, %c0_95] : memref<64x32xf32, #tpu.memory_space<vmem>>, vector<8x32xf32>
    tpu.vector_store %arg11[%378, %c0_95], %377 {strides = array<i32>} : memref<64x32xf32, #tpu.memory_space<vmem>>, vector<8x32xf32>,
    %c7_i32_96 = arith.constant 7 : i32
    %c8_i32_97 = arith.constant 8 : i32
    %380 = arith.muli %c7_i32_96, %c8_i32_97 : i32
    %381 = tpu.assume_multiple %380, 8 : i32
    %382 = arith.index_cast %381 : i32 to index
    %c0_98 = arith.constant 0 : index
    %383 = vector.load %arg12[%382, %c0_98] : memref<64x128xf32, #tpu.memory_space<vmem>>, vector<8x128xf32>
    %384 = arith.truncf %377 : vector<8x32xf32> to vector<8x32xbf16>
    %cst_99 = arith.constant dense<0.000000e+00> : vector<8x128xf32>
    %385 = tpu.matmul %384, %210, %cst_99 {dimension_numbers = #tpu.dot_dimension_numbers<[1], [0], [0], [1], [0, 0, 1, 1], [], []>} : vector<8x32xbf16>, vector<32x128xbf16>, vector<8x128xf32> -> vector<8x128xf32>
    %386 = arith.addf %383, %385 : vector<8x128xf32>
    %387 = math.tanh %386 : vector<8x128xf32>
    %388 = vector.broadcast %8 : vector<1x128xf32> to vector<8x128xf32>
    %389 = arith.mulf %387, %388 : vector<8x128xf32>
    %390 = vector.broadcast %11 : vector<1x128xf32> to vector<8x128xf32>
    %391 = arith.addf %389, %390 : vector<8x128xf32>
    %392 = vector.extract_strided_slice %391 {offsets = [0, 0], sizes = [8, 32], strides = [1, 1]} : vector<8x128xf32> to vector<8x32xf32>
    %393 = vector.extract_strided_slice %391 {offsets = [0, 32], sizes = [8, 32], strides = [1, 1]} : vector<8x128xf32> to vector<8x32xf32>
    %394 = vector.extract_strided_slice %391 {offsets = [0, 64], sizes = [8, 32], strides = [1, 1]} : vector<8x128xf32> to vector<8x32xf32>
    %395 = vector.extract_strided_slice %391 {offsets = [0, 96], sizes = [8, 32], strides = [1, 1]} : vector<8x128xf32> to vector<8x32xf32>
    %396 = arith.mulf %393, %375 : vector<8x32xf32>
    %397 = arith.mulf %392, %394 : vector<8x32xf32>
    %398 = arith.addf %396, %397 : vector<8x32xf32>
    %399 = math.tanh %398 : vector<8x32xf32>
    %400 = arith.mulf %395, %399 : vector<8x32xf32>
    %401 = arith.index_cast %381 : i32 to index
    %c0_100 = arith.constant 0 : index
    %402 = vector.load %arg11[%401, %c0_100] : memref<64x32xf32, #tpu.memory_space<vmem>>, vector<8x32xf32>
    tpu.vector_store %arg11[%401, %c0_100], %400 {strides = array<i32>} : memref<64x32xf32, #tpu.memory_space<vmem>>, vector<8x32xf32>,
    %c8_i32_101 = arith.constant 8 : i32
    %c0_102 = arith.constant 0 : index
    %c0_103 = arith.constant 0 : index
    %403 = vector.load %arg8[%c0_102, %c0_103] : memref<32x1xf32, #tpu.memory_space<vmem>>, vector<32x1xf32>
    %cst_104 = arith.constant dense<0.000000e+00> : vector<8x1xf32>
    %404 = tpu.matmul %400, %403, %cst_104 {dimension_numbers = #tpu.dot_dimension_numbers<[1], [0], [0], [1], [0, 0, 1, 1], [], []>} : vector<8x32xf32>, vector<32x1xf32>, vector<8x1xf32> -> vector<8x1xf32>
    %c0_105 = arith.constant 0 : index
    %c0_106 = arith.constant 0 : index
    %405 = vector.load %arg9[%c0_105, %c0_106] : memref<1x1xf32, #tpu.memory_space<vmem>>, vector<1x1xf32>
    %406 = vector.broadcast %405 : vector<1x1xf32> to vector<8x1xf32>
    %407 = arith.addf %404, %406 : vector<8x1xf32>
    %c0_107 = arith.constant 0 : index
    %c0_108 = arith.constant 0 : index
    %c0_109 = arith.constant 0 : index
    %408 = vector.load %arg10[%c0_107, %c0_108, %c0_109] : memref<1x8x1xf32, #tpu.memory_space<vmem>>, vector<1x8x1xf32>
    %409 = vector.shape_cast %408 : vector<1x8x1xf32> to vector<8x1xf32>
    %410 = vector.shape_cast %407 : vector<8x1xf32> to vector<1x8x1xf32>
    tpu.vector_store %arg10[%c0_107, %c0_108, %c0_109], %410 {strides = array<i32>} : memref<1x8x1xf32, #tpu.memory_space<vmem>>, vector<1x8x1xf32>,
    return
  }
  func.func @transform_0(%arg0: i32) -> (i32, i32, i32) {
    %c0_i32 = arith.constant 0 : i32
    %c0_i32_0 = arith.constant 0 : i32
    %c0_i32_1 = arith.constant 0 : i32
    return %arg0, %c0_i32, %c0_i32_0 : i32, i32, i32
  }
  func.func @transform_1(%arg0: i32) -> (i32, i32) {
    %c0_i32 = arith.constant 0 : i32
    %c0_i32_0 = arith.constant 0 : i32
    %c0_i32_1 = arith.constant 0 : i32
    return %c0_i32, %c0_i32_0 : i32, i32
  }
  func.func @transform_2(%arg0: i32) -> (i32, i32) {
    %c0_i32 = arith.constant 0 : i32
    %c0_i32_0 = arith.constant 0 : i32
    %c0_i32_1 = arith.constant 0 : i32
    return %c0_i32, %c0_i32_0 : i32, i32
  }
  func.func @transform_3(%arg0: i32) -> (i32, i32) {
    %c0_i32 = arith.constant 0 : i32
    %c0_i32_0 = arith.constant 0 : i32
    %c0_i32_1 = arith.constant 0 : i32
    return %c0_i32, %c0_i32_0 : i32, i32
  }
  func.func @transform_4(%arg0: i32) -> (i32, i32) {
    %c0_i32 = arith.constant 0 : i32
    %c0_i32_0 = arith.constant 0 : i32
    %c0_i32_1 = arith.constant 0 : i32
    return %c0_i32, %c0_i32_0 : i32, i32
  }
  func.func @transform_5(%arg0: i32) -> (i32, i32) {
    %c0_i32 = arith.constant 0 : i32
    %c0_i32_0 = arith.constant 0 : i32
    %c0_i32_1 = arith.constant 0 : i32
    return %c0_i32, %c0_i32_0 : i32, i32
  }
  func.func @transform_6(%arg0: i32) -> (i32, i32) {
    %c0_i32 = arith.constant 0 : i32
    %c0_i32_0 = arith.constant 0 : i32
    %c0_i32_1 = arith.constant 0 : i32
    return %c0_i32, %c0_i32_0 : i32, i32
  }
  func.func @transform_7(%arg0: i32) -> (i32, i32) {
    %c0_i32 = arith.constant 0 : i32
    %c0_i32_0 = arith.constant 0 : i32
    %c0_i32_1 = arith.constant 0 : i32
    return %c0_i32, %c0_i32_0 : i32, i32
  }
  func.func @transform_8(%arg0: i32) -> (i32, i32) {
    %c0_i32 = arith.constant 0 : i32
    %c0_i32_0 = arith.constant 0 : i32
    %c0_i32_1 = arith.constant 0 : i32
    return %c0_i32, %c0_i32_0 : i32, i32
  }
  func.func @transform_9(%arg0: i32) -> (i32, i32, i32) {
    %c0_i32 = arith.constant 0 : i32
    %c0_i32_0 = arith.constant 0 : i32
    %c0_i32_1 = arith.constant 0 : i32
    return %arg0, %c0_i32, %c0_i32_0 : i32, i32, i32
  }
}

</mosaic_0001>

<llo_original>
// kernel: rnn_forward.1
$region0: #{rnn_forward.1}
  #allocation0 [shape = 'u32[]', space=smem, size = 0x4, offset = 0x4, fixed_abs, tag = 'smem constant byte address 0x4 - core index']
  #allocation1 [shape = 'u32[144,128]{1,0:T(1,128)}', space=vmem, size = 0x12000, scoped, tag = 'internal scratch']
  #allocation2 [shape = 'f32[64,32]{1,0:T(8,128)}', space=vmem, size = 0x8000, scoped, tag = 'scratch operand']
  #allocation3 [shape = 'f32[64,128]{1,0:T(8,128)}', space=vmem, size = 0x8000, scoped, tag = 'scratch operand']
  #allocation4 [shape = 'f32[1,1]{1,0:T(1,128)S(1)}', space=vmem, size = 0x200, scoped, tag = 'scoped memory for rnn_forward.1']
  %s0 = inlined_call_operand.vmem [shape: f32[1,64,4], index: 0, kind: input, shape index: {}]
  %s1 = inlined_call_operand.vmem [shape: f32[4,128], index: 1, kind: input, shape index: {}]
  %s2 = inlined_call_operand.vmem [shape: f32[32,128], index: 2, kind: input, shape index: {}]
  %s3 = inlined_call_operand.vmem [shape: f32[1,128], index: 3, kind: input, shape index: {}]
  %s4 = inlined_call_operand.vmem [shape: f32[32,128], index: 4, kind: input, shape index: {}]
  %s5 = inlined_call_operand.vmem [shape: f32[32,128], index: 5, kind: input, shape index: {}]
  %s6 = inlined_call_operand.vmem [shape: f32[1,128], index: 6, kind: input, shape index: {}]
  %s7 = inlined_call_operand.vmem [shape: f32[32,1], index: 7, kind: input, shape index: {}]
  %s8 = inlined_call_operand.<no memory space> [shape: f32[1,1], index: 8, kind: input, shape index: {}]
  %s9 = inlined_call_operand.vmem [shape: f32[1,8,1], index: 9, kind: output, shape index: {}]
  %s10 = sld [smem:[#allocation0]]
  $region46: #{rnn_forward.1} parent=0
    _
  %s12 = ssub.s32 1, %s10
  %s13 = scalar_select 0, %s12, %s10
  %v14 = vstv %s8
  %15 = vst [vmem:[#allocation4] sm:$0x1] %v14
  // Predicated region
  $region2: #{rnn_forward.1} parent=0 // pred_check
    _
  $region3: #{rnn_forward.1} parent=0 // pred_check_branch
    %17 = sbr.rel (0) target = $region5
  $region4: #{rnn_forward.1} parent=0 // pred_region
    _
  $region5: #{rnn_forward.1} parent=0 // pred_fallthru
    _
  // Predicated region
  $region6: #{rnn_forward.1} parent=0 // pred_check
    _
  $region7: #{rnn_forward.1} parent=0 // pred_check_branch
    %19 = sbr.rel (0) target = $region9
  $region8: #{rnn_forward.1} parent=0 // pred_region
    _
  $region9: #{rnn_forward.1} parent=0 // pred_fallthru
    _
  // Predicated region
  $region10: #{rnn_forward.1} parent=0 // pred_check
    _
  $region11: #{rnn_forward.1} parent=0 // pred_check_branch
    %21 = sbr.rel (0) target = $region13
  $region12: #{rnn_forward.1} parent=0 // pred_region
    _
  $region13: #{rnn_forward.1} parent=0 // pred_fallthru
    _
  // Predicated region
  $region14: #{rnn_forward.1} parent=0 // pred_check
    _
  $region15: #{rnn_forward.1} parent=0 // pred_check_branch
    %23 = sbr.rel (0) target = $region17
  $region16: #{rnn_forward.1} parent=0 // pred_region
    _
  $region17: #{rnn_forward.1} parent=0 // pred_fallthru
    _
  // Predicated region
  $region18: #{rnn_forward.1} parent=0 // pred_check
    _
  $region19: #{rnn_forward.1} parent=0 // pred_check_branch
    %25 = sbr.rel (0) target = $region21
  $region20: #{rnn_forward.1} parent=0 // pred_region
    _
  $region21: #{rnn_forward.1} parent=0 // pred_fallthru
    _
  // Predicated region
  $region22: #{rnn_forward.1} parent=0 // pred_check
    _
  $region23: #{rnn_forward.1} parent=0 // pred_check_branch
    %27 = sbr.rel (0) target = $region25
  $region24: #{rnn_forward.1} parent=0 // pred_region
    _
  $region25: #{rnn_forward.1} parent=0 // pred_fallthru
    _
  // Predicated region
  $region26: #{rnn_forward.1} parent=0 // pred_check
    _
  $region27: #{rnn_forward.1} parent=0 // pred_check_branch
    %29 = sbr.rel (0) target = $region29
  $region28: #{rnn_forward.1} parent=0 // pred_region
    _
  $region29: #{rnn_forward.1} parent=0 // pred_fallthru
    _
  // Predicated region
  $region30: #{rnn_forward.1} parent=0 // pred_check
    _
  $region31: #{rnn_forward.1} parent=0 // pred_check_branch
    %31 = sbr.rel (0) target = $region33
  $region32: #{rnn_forward.1} parent=0 // pred_region
    _
  $region33: #{rnn_forward.1} parent=0 // pred_fallthru
    _
  // Predicated region
  $region34: #{rnn_forward.1} parent=0 // pred_check
    _
  $region35: #{rnn_forward.1} parent=0 // pred_check_branch
    %33 = sbr.rel (0) target = $region37
  $region36: #{rnn_forward.1} parent=0 // pred_region
    _
  $region37: #{rnn_forward.1} parent=0 // pred_fallthru
    _
  %v35 = vlaneseq
  %v36 = vand.u32 %v35, 127
  %vm37 = vcmp.ge.s32.totalorder %v36, 64
  %vm38 = vcmp.lt.s32.totalorder %v36, 96
  %vm39 = vmand %vm37, %vm38
  %v40 = vsel %vm39, 1.0, 0.5
  %v41 = vsel %vm39, 0.0, 0.5
  %v42 = vld [vmem:[%s1] sm:$0xf]
  %v43 = vld [vmem:[%s2] sm:$0xff]
  %v44 = vld [vmem:[%s2 + $0x8] sm:$0xff]
  %v45 = vld [vmem:[%s2 + $0x10] sm:$0xff]
  %v46 = vld [vmem:[%s2 + $0x18] sm:$0xff]
  %v47 = vpack.c.bf16 %v44, %v43
  %v48 = vpack.c.bf16 %v46, %v45
  %v49 = vld [vmem:[%s3] sm:$0x1]
  %v50 = vld [vmem:[%s0] sm:$0xff]
  %v51 = vld [vmem:[%s0 + $0x8] sm:$0xff]
  %v52 = vld [vmem:[%s0 + $0x10] sm:$0xff]
  %v53 = vld [vmem:[%s0 + $0x18] sm:$0xff]
  %v54 = vld [vmem:[%s0 + $0x20] sm:$0xff]
  %v55 = vld [vmem:[%s0 + $0x28] sm:$0xff]
  %v56 = vld [vmem:[%s0 + $0x30] sm:$0xff]
  %v57 = vld [vmem:[%s0 + $0x38] sm:$0xff]
  %v59 = vlaneseq
  %v60 = vshrl.u32 %v59, 7
  %v61 = vsub.s32 0, %v60
  %v62 = vrot.slane %v49, %v61
  %vm64 = vcmask 31744
  %v66 = vsel %vm64, %v50, 0
  %v69 = vsel %vm64, %v51, 0
  %v72 = vsel %vm64, %v52, 0
  %v75 = vsel %vm64, %v53, 0
  %v78 = vsel %vm64, %v54, 0
  %v81 = vsel %vm64, %v55, 0
  %v84 = vsel %vm64, %v56, 0
  %v87 = vsel %vm64, %v57, 0
  %vm89 = vcmask 1043456
  %v91 = vsel %vm89, %v42, 0
  %93 = vmatprep.subr.mxu0 0.0
  %94 = vmatpush1.msra.mxu0 %v91
  %95 = vmatprep.subr.mxu0 0.0
  %96 = vmatpush1.msra.mxu0 0.0
  %97 = vmatprep.subr.mxu0 0.0
  %98 = vmatpush1.msra.mxu0 0.0
  %99 = vmatprep.subr.mxu0 0.0
  %100 = vmatpush1.msra.mxu0 0.0
  %101 = vmatprep.subr.mxu0 0.0
  %102 = vmatpush1.msra.mxu0 0.0
  %103 = vmatprep.subr.mxu0 0.0
  %104 = vmatpush1.msra.mxu0 0.0
  %105 = vmatprep.subr.mxu0 0.0
  %106 = vmatpush1.msra.mxu0 0.0
  %107 = vmatprep.subr.mxu0 0.0
  %108 = vmatpush1.msra.mxu0 0.0
  %109 = vmatprep.subr.mxu0 0.0
  %110 = vmatpush1.msra.mxu0 0.0
  %111 = vmatprep.subr.mxu0 0.0
  %112 = vmatpush1.msra.mxu0 0.0
  %113 = vmatprep.subr.mxu0 0.0
  %114 = vmatpush1.msra.mxu0 0.0
  %115 = vmatprep.subr.mxu0 0.0
  %116 = vmatpush1.msra.mxu0 0.0
  %117 = vmatprep.subr.mxu0 0.0
  %118 = vmatpush1.msra.mxu0 0.0
  %119 = vmatprep.subr.mxu0 0.0
  %120 = vmatpush1.msra.mxu0 0.0
  %121 = vmatprep.subr.mxu0 0.0
  %122 = vmatpush1.msra.mxu0 0.0
  %123 = vmatprep.subr.mxu0 0.0
  %124 = vmatpush1.msra.mxu0 0.0
  %125 = vmatprep.subr.mxu0 0.0
  %126 = vmatpush1.msra.mxu0 0.0
  %127 = vmatprep.subr.mxu0 0.0
  %128 = vmatpush1.msra.mxu0 0.0
  %129 = vmatprep.subr.mxu0 0.0
  %130 = vmatpush1.msra.mxu0 0.0
  %131 = vmatprep.subr.mxu0 0.0
  %132 = vmatpush1.msra.mxu0 0.0
  %133 = vmatprep.subr.mxu0 0.0
  %134 = vmatpush1.msra.mxu0 0.0
  %135 = vmatprep.subr.mxu0 0.0
  %136 = vmatpush1.msra.mxu0 0.0
  %137 = vmatprep.subr.mxu0 0.0
  %138 = vmatpush1.msra.mxu0 0.0
  %139 = vmatprep.subr.mxu0 0.0
  %140 = vmatpush1.msra.mxu0 0.0
  %141 = vmatprep.subr.mxu0 0.0
  %142 = vmatpush1.msra.mxu0 0.0
  %143 = vmatprep.subr.mxu0 0.0
  %144 = vmatpush1.msra.mxu0 0.0
  %145 = vmatprep.subr.mxu0 0.0
  %146 = vmatpush1.msra.mxu0 0.0
  %147 = vmatprep.subr.mxu0 0.0
  %148 = vmatpush1.msra.mxu0 0.0
  %149 = vmatprep.subr.mxu0 0.0
  %150 = vmatpush1.msra.mxu0 0.0
  %151 = vmatprep.subr.mxu0 0.0
  %152 = vmatpush1.msra.mxu0 0.0
  %153 = vmatprep.subr.mxu0 0.0
  %154 = vmatpush1.msra.mxu0 0.0
  %155 = vmatprep.subr.mxu0 0.0
  %156 = vmatpush1.msra.mxu0 0.0
  %157 = vmatprep.mubr.f32.mxu0 0.0
  %158 = vmatmul.mubr.f32.gmra.mrb[0].mxu0 %v66
  %v159 = vpop.f32.mrb[0].mxu0
  %v160 = vadd.f32 %v62, %v159
  %v161 = vpop.f32.mrb[0].mxu0
  %162 = vmatprep.mubr.f32.mxu0 0.0
  %163 = vmatmul.mubr.f32.gmra.mrb[0].mxu0 %v69
  %v164 = vpop.f32.mrb[0].mxu0
  %v165 = vadd.f32 %v62, %v164
  %v166 = vpop.f32.mrb[0].mxu0
  %167 = vmatprep.mubr.f32.mxu0 0.0
  %168 = vmatmul.mubr.f32.gmra.mrb[0].mxu0 %v72
  %v169 = vpop.f32.mrb[0].mxu0
  %v170 = vadd.f32 %v62, %v169
  %v171 = vpop.f32.mrb[0].mxu0
  %172 = vmatprep.mubr.f32.mxu0 0.0
  %173 = vmatmul.mubr.f32.gmra.mrb[0].mxu0 %v75
  %v174 = vpop.f32.mrb[0].mxu0
  %v175 = vadd.f32 %v62, %v174
  %v176 = vpop.f32.mrb[0].mxu0
  %177 = vmatprep.mubr.f32.mxu0 0.0
  %178 = vmatmul.mubr.f32.gmra.mrb[0].mxu0 %v78
  %v179 = vpop.f32.mrb[0].mxu0
  %v180 = vadd.f32 %v62, %v179
  %v181 = vpop.f32.mrb[0].mxu0
  %182 = vmatprep.mubr.f32.mxu0 0.0
  %183 = vmatmul.mubr.f32.gmra.mrb[0].mxu0 %v81
  %v184 = vpop.f32.mrb[0].mxu0
  %v185 = vadd.f32 %v62, %v184
  %v186 = vpop.f32.mrb[0].mxu0
  %187 = vmatprep.mubr.f32.mxu0 0.0
  %188 = vmatmul.mubr.f32.gmra.mrb[0].mxu0 %v84
  %v189 = vpop.f32.mrb[0].mxu0
  %v190 = vadd.f32 %v62, %v189
  %v191 = vpop.f32.mrb[0].mxu0
  %192 = vmatprep.mubr.f32.mxu0 0.0
  %193 = vmatmul.mubr.f32.gmra.mrb[0].mxu0 %v87
  %v194 = vpop.f32.mrb[0].mxu0
  %v195 = vadd.f32 %v62, %v194
  %v196 = vpop.f32.mrb[0].mxu0
  %197 = vdwg.mxu0
  %198 = vst [vmem:[#allocation3] sm:$0xff] %v160
  %199 = vst [vmem:[#allocation3 + $0x8] sm:$0xff] %v165
  %200 = vst [vmem:[#allocation3 + $0x10] sm:$0xff] %v170
  %201 = vst [vmem:[#allocation3 + $0x18] sm:$0xff] %v175
  %202 = vst [vmem:[#allocation3 + $0x20] sm:$0xff] %v180
  %203 = vst [vmem:[#allocation3 + $0x28] sm:$0xff] %v185
  %204 = vst [vmem:[#allocation3 + $0x30] sm:$0xff] %v190
  %205 = vst [vmem:[#allocation3 + $0x38] sm:$0xff] %v195
  %v206 = vld [vmem:[#allocation3] sm:$0xff]
  %vm207 = vcmask 261120
  %v209 = vsel %vm207, 0, 0
  %211 = vmatprep.subr.bf16.mxu0 0
  %212 = vmatpush1.bf16.msra.mxu0 %v47
  %213 = vmatprep.subr.bf16.mxu0 0
  %214 = vmatpush1.bf16.msra.mxu0 %v48
  %215 = vmatprep.subr.bf16.mxu0 0
  %216 = vmatpush1.bf16.msra.mxu0 0
  %217 = vmatprep.subr.bf16.mxu0 0
  %218 = vmatpush1.bf16.msra.mxu0 0
  %219 = vmatprep.subr.bf16.mxu0 0
  %220 = vmatpush1.bf16.msra.mxu0 0
  %221 = vmatprep.subr.bf16.mxu0 0
  %222 = vmatpush1.bf16.msra.mxu0 0
  %223 = vmatprep.subr.bf16.mxu0 0
  %224 = vmatpush1.bf16.msra.mxu0 0
  %225 = vmatprep.subr.bf16.mxu0 0
  %226 = vmatpush1.bf16.msra.mxu0 0
  %227 = vmatprep.subr.bf16.mxu0 0
  %228 = vmatpush1.bf16.msra.mxu0 0
  %229 = vmatprep.subr.bf16.mxu0 0
  %230 = vmatpush1.bf16.msra.mxu0 0
  %231 = vmatprep.subr.bf16.mxu0 0
  %232 = vmatpush1.bf16.msra.mxu0 0
  %233 = vmatprep.subr.bf16.mxu0 0
  %234 = vmatpush1.bf16.msra.mxu0 0
  %235 = vmatprep.subr.bf16.mxu0 0
  %236 = vmatpush1.bf16.msra.mxu0 0
  %237 = vmatprep.subr.bf16.mxu0 0
  %238 = vmatpush1.bf16.msra.mxu0 0
  %239 = vmatprep.subr.bf16.mxu0 0
  %240 = vmatpush1.bf16.msra.mxu0 0
  %241 = vmatprep.subr.bf16.mxu0 0
  %242 = vmatpush1.bf16.msra.mxu0 0
  %243 = vmatprep.mubr.bf16.mxu0 0
  %244 = vmatmul.mubr.bf16.gmra.mrb[0].mxu0 %v209
  %v245 = vpop.f32.mrb[0].mxu0
  %v246 = vadd.f32 0.0, %v245
  %v247 = vpop.f32.mrb[0].mxu0
  %v248 = vpop.f32.mrb[0].mxu0
  %v249 = vpop.f32.mrb[0].mxu0
  %250 = vdwg.mxu0
  %v251 = vadd.f32 %v206, %v246
  %v252 = vtanh.pop %v251
  %v253 = vmul.f32 %v252, %v40
  %v254 = vadd.f32 %v253, %v41
  %v255 = vmul.f32 %v254, 0.0
  %257 = vrot.lane.b32.xlu0 %v254, 64
  %v258 = vpop.permute.xlu0 %257
  %v260 = vmul.f32 %v254, %v258
  %262 = vrot.lane.b32.xlu0 %v260, 32
  %v263 = vpop.permute.xlu0 %262
  %v265 = vadd.f32 %v255, %v263
  %v266 = vtanh.pop %v265
  %268 = vrot.lane.b32.xlu0 %v266, 64
  %v269 = vpop.permute.xlu0 %268
  %v271 = vmul.f32 %v254, %v269
  %273 = vrot.lane.b32.xlu0 %v271, 32
  %v274 = vpop.permute.xlu0 %273
  %276 = vst.msk [vmem:[#allocation2] sm:$0xff] %vm207, %v274
  %s277 = scalar_lea.vmem [#allocation3], 8
  %v278 = vld [vmem:[%s277] sm:$0xff]
  %v279 = vpack.c.bf16 %v271, %v271
  %281 = vrot.lane.b32.xlu0 %v279, 32
  %v282 = vpop.permute.xlu0 %281
  %v284 = vsel %vm207, %v282, 0
  %286 = vmatprep.subr.bf16.mxu0 0
  %287 = vmatpush1.bf16.msra.mxu0 %v47
  %288 = vmatprep.subr.bf16.mxu0 0
  %289 = vmatpush1.bf16.msra.mxu0 %v48
  %290 = vmatprep.subr.bf16.mxu0 0
  %291 = vmatpush1.bf16.msra.mxu0 0
  %292 = vmatprep.subr.bf16.mxu0 0
  %293 = vmatpush1.bf16.msra.mxu0 0
  %294 = vmatprep.subr.bf16.mxu0 0
  %295 = vmatpush1.bf16.msra.mxu0 0
  %296 = vmatprep.subr.bf16.mxu0 0
  %297 = vmatpush1.bf16.msra.mxu0 0
  %298 = vmatprep.subr.bf16.mxu0 0
  %299 = vmatpush1.bf16.msra.mxu0 0
  %300 = vmatprep.subr.bf16.mxu0 0
  %301 = vmatpush1.bf16.msra.mxu0 0
  %302 = vmatprep.subr.bf16.mxu0 0
  %303 = vmatpush1.bf16.msra.mxu0 0
  %304 = vmatprep.subr.bf16.mxu0 0
  %305 = vmatpush1.bf16.msra.mxu0 0
  %306 = vmatprep.subr.bf16.mxu0 0
  %307 = vmatpush1.bf16.msra.mxu0 0
  %308 = vmatprep.subr.bf16.mxu0 0
  %309 = vmatpush1.bf16.msra.mxu0 0
  %310 = vmatprep.subr.bf16.mxu0 0
  %311 = vmatpush1.bf16.msra.mxu0 0
  %312 = vmatprep.subr.bf16.mxu0 0
  %313 = vmatpush1.bf16.msra.mxu0 0
  %314 = vmatprep.subr.bf16.mxu0 0
  %315 = vmatpush1.bf16.msra.mxu0 0
  %316 = vmatprep.subr.bf16.mxu0 0
  %317 = vmatpush1.bf16.msra.mxu0 0
  %318 = vmatprep.mubr.bf16.mxu0 0
  %319 = vmatmul.mubr.bf16.gmra.mrb[0].mxu0 %v284
  %v320 = vpop.f32.mrb[0].mxu0
  %v321 = vadd.f32 0.0, %v320
  %v322 = vpop.f32.mrb[0].mxu0
  %v323 = vpop.f32.mrb[0].mxu0
  %v324 = vpop.f32.mrb[0].mxu0
  %325 = vdwg.mxu0
  %v326 = vadd.f32 %v278, %v321
  %v327 = vtanh.pop %v326
  %v328 = vmul.f32 %v327, %v40
  %v329 = vadd.f32 %v328, %v41
  %v330 = vmul.f32 %v329, %v265
  %332 = vrot.lane.b32.xlu0 %v329, 64
  %v333 = vpop.permute.xlu0 %332
  %v335 = vmul.f32 %v329, %v333
  %337 = vrot.lane.b32.xlu0 %v335, 32
  %v338 = vpop.permute.xlu0 %337
  %v340 = vadd.f32 %v330, %v338
  %v341 = vtanh.pop %v340
  %343 = vrot.lane.b32.xlu0 %v341, 64
  %v344 = vpop.permute.xlu0 %343
  %v346 = vmul.f32 %v329, %v344
  %348 = vrot.lane.b32.xlu0 %v346, 32
  %v349 = vpop.permute.xlu0 %348
  %s351 = scalar_lea.vmem [#allocation2], 8
  %352 = vst.msk [vmem:[%s351] sm:$0xff] %vm207, %v349
  %s353 = scalar_lea.vmem [#allocation3], 16
  %v354 = vld [vmem:[%s353] sm:$0xff]
  %v355 = vpack.c.bf16 %v346, %v346
  %357 = vrot.lane.b32.xlu0 %v355, 32
  %v358 = vpop.permute.xlu0 %357
  %v360 = vsel %vm207, %v358, 0
  %362 = vmatprep.subr.bf16.mxu0 0
  %363 = vmatpush1.bf16.msra.mxu0 %v47
  %364 = vmatprep.subr.bf16.mxu0 0
  %365 = vmatpush1.bf16.msra.mxu0 %v48
  %366 = vmatprep.subr.bf16.mxu0 0
  %367 = vmatpush1.bf16.msra.mxu0 0
  %368 = vmatprep.subr.bf16.mxu0 0
  %369 = vmatpush1.bf16.msra.mxu0 0
  %370 = vmatprep.subr.bf16.mxu0 0
  %371 = vmatpush1.bf16.msra.mxu0 0
  %372 = vmatprep.subr.bf16.mxu0 0
  %373 = vmatpush1.bf16.msra.mxu0 0
  %374 = vmatprep.subr.bf16.mxu0 0
  %375 = vmatpush1.bf16.msra.mxu0 0
  %376 = vmatprep.subr.bf16.mxu0 0
  %377 = vmatpush1.bf16.msra.mxu0 0
  %378 = vmatprep.subr.bf16.mxu0 0
  %379 = vmatpush1.bf16.msra.mxu0 0
  %380 = vmatprep.subr.bf16.mxu0 0
  %381 = vmatpush1.bf16.msra.mxu0 0
  %382 = vmatprep.subr.bf16.mxu0 0
  %383 = vmatpush1.bf16.msra.mxu0 0
  %384 = vmatprep.subr.bf16.mxu0 0
  %385 = vmatpush1.bf16.msra.mxu0 0
  %386 = vmatprep.subr.bf16.mxu0 0
  %387 = vmatpush1.bf16.msra.mxu0 0
  %388 = vmatprep.subr.bf16.mxu0 0
  %389 = vmatpush1.bf16.msra.mxu0 0
  %390 = vmatprep.subr.bf16.mxu0 0
  %391 = vmatpush1.bf16.msra.mxu0 0
  %392 = vmatprep.subr.bf16.mxu0 0
  %393 = vmatpush1.bf16.msra.mxu0 0
  %394 = vmatprep.mubr.bf16.mxu0 0
  %395 = vmatmul.mubr.bf16.gmra.mrb[0].mxu0 %v360
  %v396 = vpop.f32.mrb[0].mxu0
  %v397 = vadd.f32 0.0, %v396
  %v398 = vpop.f32.mrb[0].mxu0
  %v399 = vpop.f32.mrb[0].mxu0
  %v400 = vpop.f32.mrb[0].mxu0
  %401 = vdwg.mxu0
  %v402 = vadd.f32 %v354, %v397
  %v403 = vtanh.pop %v402
  %v404 = vmul.f32 %v403, %v40
  %v405 = vadd.f32 %v404, %v41
  %v406 = vmul.f32 %v405, %v340
  %408 = vrot.lane.b32.xlu0 %v405, 64
  %v409 = vpop.permute.xlu0 %408
  %v411 = vmul.f32 %v405, %v409
  %413 = vrot.lane.b32.xlu0 %v411, 32
  %v414 = vpop.permute.xlu0 %413
  %v416 = vadd.f32 %v406, %v414
  %v417 = vtanh.pop %v416
  %419 = vrot.lane.b32.xlu0 %v417, 64
  %v420 = vpop.permute.xlu0 %419
  %v422 = vmul.f32 %v405, %v420
  %424 = vrot.lane.b32.xlu0 %v422, 32
  %v425 = vpop.permute.xlu0 %424
  %s427 = scalar_lea.vmem [#allocation2], 16
  %428 = vst.msk [vmem:[%s427] sm:$0xff] %vm207, %v425
  %s429 = scalar_lea.vmem [#allocation3], 24
  %v430 = vld [vmem:[%s429] sm:$0xff]
  %v431 = vpack.c.bf16 %v422, %v422
  %433 = vrot.lane.b32.xlu0 %v431, 32
  %v434 = vpop.permute.xlu0 %433
  %v436 = vsel %vm207, %v434, 0
  %438 = vmatprep.subr.bf16.mxu0 0
  %439 = vmatpush1.bf16.msra.mxu0 %v47
  %440 = vmatprep.subr.bf16.mxu0 0
  %441 = vmatpush1.bf16.msra.mxu0 %v48
  %442 = vmatprep.subr.bf16.mxu0 0
  %443 = vmatpush1.bf16.msra.mxu0 0
  %444 = vmatprep.subr.bf16.mxu0 0
  %445 = vmatpush1.bf16.msra.mxu0 0
  %446 = vmatprep.subr.bf16.mxu0 0
  %447 = vmatpush1.bf16.msra.mxu0 0
  %448 = vmatprep.subr.bf16.mxu0 0
  %449 = vmatpush1.bf16.msra.mxu0 0
  %450 = vmatprep.subr.bf16.mxu0 0
  %451 = vmatpush1.bf16.msra.mxu0 0
  %452 = vmatprep.subr.bf16.mxu0 0
  %453 = vmatpush1.bf16.msra.mxu0 0
  %454 = vmatprep.subr.bf16.mxu0 0
  %455 = vmatpush1.bf16.msra.mxu0 0
  %456 = vmatprep.subr.bf16.mxu0 0
  %457 = vmatpush1.bf16.msra.mxu0 0
  %458 = vmatprep.subr.bf16.mxu0 0
  %459 = vmatpush1.bf16.msra.mxu0 0
  %460 = vmatprep.subr.bf16.mxu0 0
  %461 = vmatpush1.bf16.msra.mxu0 0
  %462 = vmatprep.subr.bf16.mxu0 0
  %463 = vmatpush1.bf16.msra.mxu0 0
  %464 = vmatprep.subr.bf16.mxu0 0
  %465 = vmatpush1.bf16.msra.mxu0 0
  %466 = vmatprep.subr.bf16.mxu0 0
  %467 = vmatpush1.bf16.msra.mxu0 0
  %468 = vmatprep.subr.bf16.mxu0 0
  %469 = vmatpush1.bf16.msra.mxu0 0
  %470 = vmatprep.mubr.bf16.mxu0 0
  %471 = vmatmul.mubr.bf16.gmra.mrb[0].mxu0 %v436
  %v472 = vpop.f32.mrb[0].mxu0
  %v473 = vadd.f32 0.0, %v472
  %v474 = vpop.f32.mrb[0].mxu0
  %v475 = vpop.f32.mrb[0].mxu0
  %v476 = vpop.f32.mrb[0].mxu0
  %477 = vdwg.mxu0
  %v478 = vadd.f32 %v430, %v473
  %v479 = vtanh.pop %v478
  %v480 = vmul.f32 %v479, %v40
  %v481 = vadd.f32 %v480, %v41
  %v482 = vmul.f32 %v481, %v416
  %484 = vrot.lane.b32.xlu0 %v481, 64
  %v485 = vpop.permute.xlu0 %484
  %v487 = vmul.f32 %v481, %v485
  %489 = vrot.lane.b32.xlu0 %v487, 32
  %v490 = vpop.permute.xlu0 %489
  %v492 = vadd.f32 %v482, %v490
  %v493 = vtanh.pop %v492
  %495 = vrot.lane.b32.xlu0 %v493, 64
  %v496 = vpop.permute.xlu0 %495
  %v498 = vmul.f32 %v481, %v496
  %500 = vrot.lane.b32.xlu0 %v498, 32
  %v501 = vpop.permute.xlu0 %500
  %s503 = scalar_lea.vmem [#allocation2], 24
  %504 = vst.msk [vmem:[%s503] sm:$0xff] %vm207, %v501
  %s505 = scalar_lea.vmem [#allocation3], 32
  %v506 = vld [vmem:[%s505] sm:$0xff]
  %v507 = vpack.c.bf16 %v498, %v498
  %509 = vrot.lane.b32.xlu0 %v507, 32
  %v510 = vpop.permute.xlu0 %509
  %v512 = vsel %vm207, %v510, 0
  %514 = vmatprep.subr.bf16.mxu0 0
  %515 = vmatpush1.bf16.msra.mxu0 %v47
  %516 = vmatprep.subr.bf16.mxu0 0
  %517 = vmatpush1.bf16.msra.mxu0 %v48
  %518 = vmatprep.subr.bf16.mxu0 0
  %519 = vmatpush1.bf16.msra.mxu0 0
  %520 = vmatprep.subr.bf16.mxu0 0
  %521 = vmatpush1.bf16.msra.mxu0 0
  %522 = vmatprep.subr.bf16.mxu0 0
  %523 = vmatpush1.bf16.msra.mxu0 0
  %524 = vmatprep.subr.bf16.mxu0 0
  %525 = vmatpush1.bf16.msra.mxu0 0
  %526 = vmatprep.subr.bf16.mxu0 0
  %527 = vmatpush1.bf16.msra.mxu0 0
  %528 = vmatprep.subr.bf16.mxu0 0
  %529 = vmatpush1.bf16.msra.mxu0 0
  %530 = vmatprep.subr.bf16.mxu0 0
  %531 = vmatpush1.bf16.msra.mxu0 0
  %532 = vmatprep.subr.bf16.mxu0 0
  %533 = vmatpush1.bf16.msra.mxu0 0
  %534 = vmatprep.subr.bf16.mxu0 0
  %535 = vmatpush1.bf16.msra.mxu0 0
  %536 = vmatprep.subr.bf16.mxu0 0
  %537 = vmatpush1.bf16.msra.mxu0 0
  %538 = vmatprep.subr.bf16.mxu0 0
  %539 = vmatpush1.bf16.msra.mxu0 0
  %540 = vmatprep.subr.bf16.mxu0 0
  %541 = vmatpush1.bf16.msra.mxu0 0
  %542 = vmatprep.subr.bf16.mxu0 0
  %543 = vmatpush1.bf16.msra.mxu0 0
  %544 = vmatprep.subr.bf16.mxu0 0
  %545 = vmatpush1.bf16.msra.mxu0 0
  %546 = vmatprep.mubr.bf16.mxu0 0
  %547 = vmatmul.mubr.bf16.gmra.mrb[0].mxu0 %v512
  %v548 = vpop.f32.mrb[0].mxu0
  %v549 = vadd.f32 0.0, %v548
  %v550 = vpop.f32.mrb[0].mxu0
  %v551 = vpop.f32.mrb[0].mxu0
  %v552 = vpop.f32.mrb[0].mxu0
  %553 = vdwg.mxu0
  %v554 = vadd.f32 %v506, %v549
  %v555 = vtanh.pop %v554
  %v556 = vmul.f32 %v555, %v40
  %v557 = vadd.f32 %v556, %v41
  %v558 = vmul.f32 %v557, %v492
  %560 = vrot.lane.b32.xlu0 %v557, 64
  %v561 = vpop.permute.xlu0 %560
  %v563 = vmul.f32 %v557, %v561
  %565 = vrot.lane.b32.xlu0 %v563, 32
  %v566 = vpop.permute.xlu0 %565
  %v568 = vadd.f32 %v558, %v566
  %v569 = vtanh.pop %v568
  %571 = vrot.lane.b32.xlu0 %v569, 64
  %v572 = vpop.permute.xlu0 %571
  %v574 = vmul.f32 %v557, %v572
  %576 = vrot.lane.b32.xlu0 %v574, 32
  %v577 = vpop.permute.xlu0 %576
  %s579 = scalar_lea.vmem [#allocation2], 32
  %580 = vst.msk [vmem:[%s579] sm:$0xff] %vm207, %v577
  %s581 = scalar_lea.vmem [#allocation3], 40
  %v582 = vld [vmem:[%s581] sm:$0xff]
  %v583 = vpack.c.bf16 %v574, %v574
  %585 = vrot.lane.b32.xlu0 %v583, 32
  %v586 = vpop.permute.xlu0 %585
  %v588 = vsel %vm207, %v586, 0
  %590 = vmatprep.subr.bf16.mxu0 0
  %591 = vmatpush1.bf16.msra.mxu0 %v47
  %592 = vmatprep.subr.bf16.mxu0 0
  %593 = vmatpush1.bf16.msra.mxu0 %v48
  %594 = vmatprep.subr.bf16.mxu0 0
  %595 = vmatpush1.bf16.msra.mxu0 0
  %596 = vmatprep.subr.bf16.mxu0 0
  %597 = vmatpush1.bf16.msra.mxu0 0
  %598 = vmatprep.subr.bf16.mxu0 0
  %599 = vmatpush1.bf16.msra.mxu0 0
  %600 = vmatprep.subr.bf16.mxu0 0
  %601 = vmatpush1.bf16.msra.mxu0 0
  %602 = vmatprep.subr.bf16.mxu0 0
  %603 = vmatpush1.bf16.msra.mxu0 0
  %604 = vmatprep.subr.bf16.mxu0 0
  %605 = vmatpush1.bf16.msra.mxu0 0
  %606 = vmatprep.subr.bf16.mxu0 0
  %607 = vmatpush1.bf16.msra.mxu0 0
  %608 = vmatprep.subr.bf16.mxu0 0
  %609 = vmatpush1.bf16.msra.mxu0 0
  %610 = vmatprep.subr.bf16.mxu0 0
  %611 = vmatpush1.bf16.msra.mxu0 0
  %612 = vmatprep.subr.bf16.mxu0 0
  %613 = vmatpush1.bf16.msra.mxu0 0
  %614 = vmatprep.subr.bf16.mxu0 0
  %615 = vmatpush1.bf16.msra.mxu0 0
  %616 = vmatprep.subr.bf16.mxu0 0
  %617 = vmatpush1.bf16.msra.mxu0 0
  %618 = vmatprep.subr.bf16.mxu0 0
  %619 = vmatpush1.bf16.msra.mxu0 0
  %620 = vmatprep.subr.bf16.mxu0 0
  %621 = vmatpush1.bf16.msra.mxu0 0
  %622 = vmatprep.mubr.bf16.mxu0 0
  %623 = vmatmul.mubr.bf16.gmra.mrb[0].mxu0 %v588
  %v624 = vpop.f32.mrb[0].mxu0
  %v625 = vadd.f32 0.0, %v624
  %v626 = vpop.f32.mrb[0].mxu0
  %v627 = vpop.f32.mrb[0].mxu0
  %v628 = vpop.f32.mrb[0].mxu0
  %629 = vdwg.mxu0
  %v630 = vadd.f32 %v582, %v625
  %v631 = vtanh.pop %v630
  %v632 = vmul.f32 %v631, %v40
  %v633 = vadd.f32 %v632, %v41
  %v634 = vmul.f32 %v633, %v568
  %636 = vrot.lane.b32.xlu0 %v633, 64
  %v637 = vpop.permute.xlu0 %636
  %v639 = vmul.f32 %v633, %v637
  %641 = vrot.lane.b32.xlu0 %v639, 32
  %v642 = vpop.permute.xlu0 %641
  %v644 = vadd.f32 %v634, %v642
  %v645 = vtanh.pop %v644
  %647 = vrot.lane.b32.xlu0 %v645, 64
  %v648 = vpop.permute.xlu0 %647
  %v650 = vmul.f32 %v633, %v648
  %652 = vrot.lane.b32.xlu0 %v650, 32
  %v653 = vpop.permute.xlu0 %652
  %s655 = scalar_lea.vmem [#allocation2], 40
  %656 = vst.msk [vmem:[%s655] sm:$0xff] %vm207, %v653
  %s657 = scalar_lea.vmem [#allocation3], 48
  %v658 = vld [vmem:[%s657] sm:$0xff]
  %v659 = vpack.c.bf16 %v650, %v650
  %661 = vrot.lane.b32.xlu0 %v659, 32
  %v662 = vpop.permute.xlu0 %661
  %v664 = vsel %vm207, %v662, 0
  %666 = vmatprep.subr.bf16.mxu0 0
  %667 = vmatpush1.bf16.msra.mxu0 %v47
  %668 = vmatprep.subr.bf16.mxu0 0
  %669 = vmatpush1.bf16.msra.mxu0 %v48
  %670 = vmatprep.subr.bf16.mxu0 0
  %671 = vmatpush1.bf16.msra.mxu0 0
  %672 = vmatprep.subr.bf16.mxu0 0
  %673 = vmatpush1.bf16.msra.mxu0 0
  %674 = vmatprep.subr.bf16.mxu0 0
  %675 = vmatpush1.bf16.msra.mxu0 0
  %676 = vmatprep.subr.bf16.mxu0 0
  %677 = vmatpush1.bf16.msra.mxu0 0
  %678 = vmatprep.subr.bf16.mxu0 0
  %679 = vmatpush1.bf16.msra.mxu0 0
  %680 = vmatprep.subr.bf16.mxu0 0
  %681 = vmatpush1.bf16.msra.mxu0 0
  %682 = vmatprep.subr.bf16.mxu0 0
  %683 = vmatpush1.bf16.msra.mxu0 0
  %684 = vmatprep.subr.bf16.mxu0 0
  %685 = vmatpush1.bf16.msra.mxu0 0
  %686 = vmatprep.subr.bf16.mxu0 0
  %687 = vmatpush1.bf16.msra.mxu0 0
  %688 = vmatprep.subr.bf16.mxu0 0
  %689 = vmatpush1.bf16.msra.mxu0 0
  %690 = vmatprep.subr.bf16.mxu0 0
  %691 = vmatpush1.bf16.msra.mxu0 0
  %692 = vmatprep.subr.bf16.mxu0 0
  %693 = vmatpush1.bf16.msra.mxu0 0
  %694 = vmatprep.subr.bf16.mxu0 0
  %695 = vmatpush1.bf16.msra.mxu0 0
  %696 = vmatprep.subr.bf16.mxu0 0
  %697 = vmatpush1.bf16.msra.mxu0 0
  %698 = vmatprep.mubr.bf16.mxu0 0
  %699 = vmatmul.mubr.bf16.gmra.mrb[0].mxu0 %v664
  %v700 = vpop.f32.mrb[0].mxu0
  %v701 = vadd.f32 0.0, %v700
  %v702 = vpop.f32.mrb[0].mxu0
  %v703 = vpop.f32.mrb[0].mxu0
  %v704 = vpop.f32.mrb[0].mxu0
  %705 = vdwg.mxu0
  %v706 = vadd.f32 %v658, %v701
  %v707 = vtanh.pop %v706
  %v708 = vmul.f32 %v707, %v40
  %v709 = vadd.f32 %v708, %v41
  %v710 = vmul.f32 %v709, %v644
  %712 = vrot.lane.b32.xlu0 %v709, 64
  %v713 = vpop.permute.xlu0 %712
  %v715 = vmul.f32 %v709, %v713
  %717 = vrot.lane.b32.xlu0 %v715, 32
  %v718 = vpop.permute.xlu0 %717
  %v720 = vadd.f32 %v710, %v718
  %v721 = vtanh.pop %v720
  %723 = vrot.lane.b32.xlu0 %v721, 64
  %v724 = vpop.permute.xlu0 %723
  %v726 = vmul.f32 %v709, %v724
  %728 = vrot.lane.b32.xlu0 %v726, 32
  %v729 = vpop.permute.xlu0 %728
  %s731 = scalar_lea.vmem [#allocation2], 48
  %732 = vst.msk [vmem:[%s731] sm:$0xff] %vm207, %v729
  %s733 = scalar_lea.vmem [#allocation3], 56
  %v734 = vld [vmem:[%s733] sm:$0xff]
  %v735 = vpack.c.bf16 %v726, %v726
  %737 = vrot.lane.b32.xlu0 %v735, 32
  %v738 = vpop.permute.xlu0 %737
  %v740 = vsel %vm207, %v738, 0
  %742 = vmatprep.subr.bf16.mxu0 0
  %743 = vmatpush1.bf16.msra.mxu0 %v47
  %744 = vmatprep.subr.bf16.mxu0 0
  %745 = vmatpush1.bf16.msra.mxu0 %v48
  %746 = vmatprep.subr.bf16.mxu0 0
  %747 = vmatpush1.bf16.msra.mxu0 0
  %748 = vmatprep.subr.bf16.mxu0 0
  %749 = vmatpush1.bf16.msra.mxu0 0
  %750 = vmatprep.subr.bf16.mxu0 0
  %751 = vmatpush1.bf16.msra.mxu0 0
  %752 = vmatprep.subr.bf16.mxu0 0
  %753 = vmatpush1.bf16.msra.mxu0 0
  %754 = vmatprep.subr.bf16.mxu0 0
  %755 = vmatpush1.bf16.msra.mxu0 0
  %756 = vmatprep.subr.bf16.mxu0 0
  %757 = vmatpush1.bf16.msra.mxu0 0
  %758 = vmatprep.subr.bf16.mxu0 0
  %759 = vmatpush1.bf16.msra.mxu0 0
  %760 = vmatprep.subr.bf16.mxu0 0
  %761 = vmatpush1.bf16.msra.mxu0 0
  %762 = vmatprep.subr.bf16.mxu0 0
  %763 = vmatpush1.bf16.msra.mxu0 0
  %764 = vmatprep.subr.bf16.mxu0 0
  %765 = vmatpush1.bf16.msra.mxu0 0
  %766 = vmatprep.subr.bf16.mxu0 0
  %767 = vmatpush1.bf16.msra.mxu0 0
  %768 = vmatprep.subr.bf16.mxu0 0
  %769 = vmatpush1.bf16.msra.mxu0 0
  %770 = vmatprep.subr.bf16.mxu0 0
  %771 = vmatpush1.bf16.msra.mxu0 0
  %772 = vmatprep.subr.bf16.mxu0 0
  %773 = vmatpush1.bf16.msra.mxu0 0
  %774 = vmatprep.mubr.bf16.mxu0 0
  %775 = vmatmul.mubr.bf16.gmra.mrb[0].mxu0 %v740
  %v776 = vpop.f32.mrb[0].mxu0
  %v777 = vadd.f32 0.0, %v776
  %v778 = vpop.f32.mrb[0].mxu0
  %v779 = vpop.f32.mrb[0].mxu0
  %v780 = vpop.f32.mrb[0].mxu0
  %781 = vdwg.mxu0
  %v782 = vadd.f32 %v734, %v777
  %v783 = vtanh.pop %v782
  %v784 = vmul.f32 %v783, %v40
  %v785 = vadd.f32 %v784, %v41
  %v786 = vmul.f32 %v785, %v720
  %788 = vrot.lane.b32.xlu0 %v785, 64
  %v789 = vpop.permute.xlu0 %788
  %v791 = vmul.f32 %v785, %v789
  %793 = vrot.lane.b32.xlu0 %v791, 32
  %v794 = vpop.permute.xlu0 %793
  %v796 = vadd.f32 %v786, %v794
  %v797 = vtanh.pop %v796
  %799 = vrot.lane.b32.xlu0 %v797, 64
  %v800 = vpop.permute.xlu0 %799
  %v802 = vmul.f32 %v785, %v800
  %804 = vrot.lane.b32.xlu0 %v802, 32
  %v805 = vpop.permute.xlu0 %804
  %s807 = scalar_lea.vmem [#allocation2], 56
  %808 = vst.msk [vmem:[%s807] sm:$0xff] %vm207, %v805
  %v809 = vld [vmem:[%s4] sm:$0xff]
  %v810 = vld [vmem:[%s4 + $0x8] sm:$0xff]
  %v811 = vld [vmem:[%s4 + $0x10] sm:$0xff]
  %v812 = vld [vmem:[%s4 + $0x18] sm:$0xff]
  %v813 = vld [vmem:[%s5] sm:$0xff]
  %v814 = vld [vmem:[%s5 + $0x8] sm:$0xff]
  %v815 = vld [vmem:[%s5 + $0x10] sm:$0xff]
  %v816 = vld [vmem:[%s5 + $0x18] sm:$0xff]
  %v817 = vpack.c.bf16 %v814, %v813
  %v818 = vpack.c.bf16 %v816, %v815
  %v819 = vld [vmem:[%s6] sm:$0x1]
  %v820 = vld [vmem:[#allocation2] sm:$0xff]
  %v821 = vld [vmem:[#allocation2 + $0x8] sm:$0xff]
  %v822 = vld [vmem:[#allocation2 + $0x10] sm:$0xff]
  %v823 = vld [vmem:[#allocation2 + $0x18] sm:$0xff]
  %v824 = vld [vmem:[#allocation2 + $0x20] sm:$0xff]
  %v825 = vld [vmem:[#allocation2 + $0x28] sm:$0xff]
  %v826 = vld [vmem:[#allocation2 + $0x30] sm:$0xff]
  %v827 = vld [vmem:[#allocation2 + $0x38] sm:$0xff]
  %v829 = vlaneseq
  %v830 = vshrl.u32 %v829, 7
  %v831 = vsub.s32 0, %v830
  %v832 = vrot.slane %v819, %v831
  %v835 = vsel %vm207, %v820, 0
  %v838 = vsel %vm207, %v821, 0
  %v841 = vsel %vm207, %v822, 0
  %v844 = vsel %vm207, %v823, 0
  %v847 = vsel %vm207, %v824, 0
  %v850 = vsel %vm207, %v825, 0
  %v853 = vsel %vm207, %v826, 0
  %v856 = vsel %vm207, %v827, 0
  %858 = vmatprep.subr.mxu0 0.0
  %859 = vmatpush1.msra.mxu0 %v809
  %860 = vmatprep.subr.mxu0 0.0
  %861 = vmatpush1.msra.mxu0 %v810
  %862 = vmatprep.subr.mxu0 0.0
  %863 = vmatpush1.msra.mxu0 %v811
  %864 = vmatprep.subr.mxu0 0.0
  %865 = vmatpush1.msra.mxu0 %v812
  %866 = vmatprep.subr.mxu0 0.0
  %867 = vmatpush1.msra.mxu0 0.0
  %868 = vmatprep.subr.mxu0 0.0
  %869 = vmatpush1.msra.mxu0 0.0
  %870 = vmatprep.subr.mxu0 0.0
  %871 = vmatpush1.msra.mxu0 0.0
  %872 = vmatprep.subr.mxu0 0.0
  %873 = vmatpush1.msra.mxu0 0.0
  %874 = vmatprep.subr.mxu0 0.0
  %875 = vmatpush1.msra.mxu0 0.0
  %876 = vmatprep.subr.mxu0 0.0
  %877 = vmatpush1.msra.mxu0 0.0
  %878 = vmatprep.subr.mxu0 0.0
  %879 = vmatpush1.msra.mxu0 0.0
  %880 = vmatprep.subr.mxu0 0.0
  %881 = vmatpush1.msra.mxu0 0.0
  %882 = vmatprep.subr.mxu0 0.0
  %883 = vmatpush1.msra.mxu0 0.0
  %884 = vmatprep.subr.mxu0 0.0
  %885 = vmatpush1.msra.mxu0 0.0
  %886 = vmatprep.subr.mxu0 0.0
  %887 = vmatpush1.msra.mxu0 0.0
  %888 = vmatprep.subr.mxu0 0.0
  %889 = vmatpush1.msra.mxu0 0.0
  %890 = vmatprep.subr.mxu0 0.0
  %891 = vmatpush1.msra.mxu0 0.0
  %892 = vmatprep.subr.mxu0 0.0
  %893 = vmatpush1.msra.mxu0 0.0
  %894 = vmatprep.subr.mxu0 0.0
  %895 = vmatpush1.msra.mxu0 0.0
  %896 = vmatprep.subr.mxu0 0.0
  %897 = vmatpush1.msra.mxu0 0.0
  %898 = vmatprep.subr.mxu0 0.0
  %899 = vmatpush1.msra.mxu0 0.0
  %900 = vmatprep.subr.mxu0 0.0
  %901 = vmatpush1.msra.mxu0 0.0
  %902 = vmatprep.subr.mxu0 0.0
  %903 = vmatpush1.msra.mxu0 0.0
  %904 = vmatprep.subr.mxu0 0.0
  %905 = vmatpush1.msra.mxu0 0.0
  %906 = vmatprep.subr.mxu0 0.0
  %907 = vmatpush1.msra.mxu0 0.0
  %908 = vmatprep.subr.mxu0 0.0
  %909 = vmatpush1.msra.mxu0 0.0
  %910 = vmatprep.subr.mxu0 0.0
  %911 = vmatpush1.msra.mxu0 0.0
  %912 = vmatprep.subr.mxu0 0.0
  %913 = vmatpush1.msra.mxu0 0.0
  %914 = vmatprep.subr.mxu0 0.0
  %915 = vmatpush1.msra.mxu0 0.0
  %916 = vmatprep.subr.mxu0 0.0
  %917 = vmatpush1.msra.mxu0 0.0
  %918 = vmatprep.subr.mxu0 0.0
  %919 = vmatpush1.msra.mxu0 0.0
  %920 = vmatprep.subr.mxu0 0.0
  %921 = vmatpush1.msra.mxu0 0.0
  %922 = vmatprep.mubr.f32.mxu0 0.0
  %923 = vmatmul.mubr.f32.gmra.mrb[0].mxu0 %v835
  %v924 = vpop.f32.mrb[0].mxu0
  %v925 = vadd.f32 %v832, %v924
  %v926 = vpop.f32.mrb[0].mxu0
  %927 = vmatprep.mubr.f32.mxu0 0.0
  %928 = vmatmul.mubr.f32.gmra.mrb[0].mxu0 %v838
  %v929 = vpop.f32.mrb[0].mxu0
  %v930 = vadd.f32 %v832, %v929
  %v931 = vpop.f32.mrb[0].mxu0
  %932 = vmatprep.mubr.f32.mxu0 0.0
  %933 = vmatmul.mubr.f32.gmra.mrb[0].mxu0 %v841
  %v934 = vpop.f32.mrb[0].mxu0
  %v935 = vadd.f32 %v832, %v934
  %v936 = vpop.f32.mrb[0].mxu0
  %937 = vmatprep.mubr.f32.mxu0 0.0
  %938 = vmatmul.mubr.f32.gmra.mrb[0].mxu0 %v844
  %v939 = vpop.f32.mrb[0].mxu0
  %v940 = vadd.f32 %v832, %v939
  %v941 = vpop.f32.mrb[0].mxu0
  %942 = vmatprep.mubr.f32.mxu0 0.0
  %943 = vmatmul.mubr.f32.gmra.mrb[0].mxu0 %v847
  %v944 = vpop.f32.mrb[0].mxu0
  %v945 = vadd.f32 %v832, %v944
  %v946 = vpop.f32.mrb[0].mxu0
  %947 = vmatprep.mubr.f32.mxu0 0.0
  %948 = vmatmul.mubr.f32.gmra.mrb[0].mxu0 %v850
  %v949 = vpop.f32.mrb[0].mxu0
  %v950 = vadd.f32 %v832, %v949
  %v951 = vpop.f32.mrb[0].mxu0
  %952 = vmatprep.mubr.f32.mxu0 0.0
  %953 = vmatmul.mubr.f32.gmra.mrb[0].mxu0 %v853
  %v954 = vpop.f32.mrb[0].mxu0
  %v955 = vadd.f32 %v832, %v954
  %v956 = vpop.f32.mrb[0].mxu0
  %957 = vmatprep.mubr.f32.mxu0 0.0
  %958 = vmatmul.mubr.f32.gmra.mrb[0].mxu0 %v856
  %v959 = vpop.f32.mrb[0].mxu0
  %v960 = vadd.f32 %v832, %v959
  %v961 = vpop.f32.mrb[0].mxu0
  %962 = vdwg.mxu0
  %963 = vst [vmem:[#allocation3] sm:$0xff] %v925
  %964 = vst [vmem:[#allocation3 + $0x8] sm:$0xff] %v930
  %965 = vst [vmem:[#allocation3 + $0x10] sm:$0xff] %v935
  %966 = vst [vmem:[#allocation3 + $0x18] sm:$0xff] %v940
  %967 = vst [vmem:[#allocation3 + $0x20] sm:$0xff] %v945
  %968 = vst [vmem:[#allocation3 + $0x28] sm:$0xff] %v950
  %969 = vst [vmem:[#allocation3 + $0x30] sm:$0xff] %v955
  %970 = vst [vmem:[#allocation3 + $0x38] sm:$0xff] %v960
  %v971 = vld [vmem:[#allocation3] sm:$0xff]
  %972 = vmatprep.subr.bf16.mxu0 0
  %973 = vmatpush1.bf16.msra.mxu0 %v817
  %974 = vmatprep.subr.bf16.mxu0 0
  %975 = vmatpush1.bf16.msra.mxu0 %v818
  %976 = vmatprep.subr.bf16.mxu0 0
  %977 = vmatpush1.bf16.msra.mxu0 0
  %978 = vmatprep.subr.bf16.mxu0 0
  %979 = vmatpush1.bf16.msra.mxu0 0
  %980 = vmatprep.subr.bf16.mxu0 0
  %981 = vmatpush1.bf16.msra.mxu0 0
  %982 = vmatprep.subr.bf16.mxu0 0
  %983 = vmatpush1.bf16.msra.mxu0 0
  %984 = vmatprep.subr.bf16.mxu0 0
  %985 = vmatpush1.bf16.msra.mxu0 0
  %986 = vmatprep.subr.bf16.mxu0 0
  %987 = vmatpush1.bf16.msra.mxu0 0
  %988 = vmatprep.subr.bf16.mxu0 0
  %989 = vmatpush1.bf16.msra.mxu0 0
  %990 = vmatprep.subr.bf16.mxu0 0
  %991 = vmatpush1.bf16.msra.mxu0 0
  %992 = vmatprep.subr.bf16.mxu0 0
  %993 = vmatpush1.bf16.msra.mxu0 0
  %994 = vmatprep.subr.bf16.mxu0 0
  %995 = vmatpush1.bf16.msra.mxu0 0
  %996 = vmatprep.subr.bf16.mxu0 0
  %997 = vmatpush1.bf16.msra.mxu0 0
  %998 = vmatprep.subr.bf16.mxu0 0
  %999 = vmatpush1.bf16.msra.mxu0 0
  %1000 = vmatprep.subr.bf16.mxu0 0
  %1001 = vmatpush1.bf16.msra.mxu0 0
  %1002 = vmatprep.subr.bf16.mxu0 0
  %1003 = vmatpush1.bf16.msra.mxu0 0
  %1004 = vmatprep.mubr.bf16.mxu0 0
  %1005 = vmatmul.mubr.bf16.gmra.mrb[0].mxu0 %v209
  %v1006 = vpop.f32.mrb[0].mxu0
  %v1007 = vadd.f32 0.0, %v1006
  %v1008 = vpop.f32.mrb[0].mxu0
  %v1009 = vpop.f32.mrb[0].mxu0
  %v1010 = vpop.f32.mrb[0].mxu0
  %1011 = vdwg.mxu0
  %v1012 = vadd.f32 %v971, %v1007
  %v1013 = vtanh.pop %v1012
  %v1014 = vmul.f32 %v1013, %v40
  %v1015 = vadd.f32 %v1014, %v41
  %v1016 = vmul.f32 %v1015, 0.0
  %1018 = vrot.lane.b32.xlu0 %v1015, 64
  %v1019 = vpop.permute.xlu0 %1018
  %v1021 = vmul.f32 %v1015, %v1019
  %1023 = vrot.lane.b32.xlu0 %v1021, 32
  %v1024 = vpop.permute.xlu0 %1023
  %v1026 = vadd.f32 %v1016, %v1024
  %v1027 = vtanh.pop %v1026
  %1029 = vrot.lane.b32.xlu0 %v1027, 64
  %v1030 = vpop.permute.xlu0 %1029
  %v1032 = vmul.f32 %v1015, %v1030
  %1034 = vrot.lane.b32.xlu0 %v1032, 32
  %v1035 = vpop.permute.xlu0 %1034
  %1037 = vst.msk [vmem:[#allocation2] sm:$0xff] %vm207, %v1035
  %v1038 = vld [vmem:[%s277] sm:$0xff]
  %v1039 = vpack.c.bf16 %v1032, %v1032
  %1041 = vrot.lane.b32.xlu0 %v1039, 32
  %v1042 = vpop.permute.xlu0 %1041
  %v1044 = vsel %vm207, %v1042, 0
  %1046 = vmatprep.subr.bf16.mxu0 0
  %1047 = vmatpush1.bf16.msra.mxu0 %v817
  %1048 = vmatprep.subr.bf16.mxu0 0
  %1049 = vmatpush1.bf16.msra.mxu0 %v818
  %1050 = vmatprep.subr.bf16.mxu0 0
  %1051 = vmatpush1.bf16.msra.mxu0 0
  %1052 = vmatprep.subr.bf16.mxu0 0
  %1053 = vmatpush1.bf16.msra.mxu0 0
  %1054 = vmatprep.subr.bf16.mxu0 0
  %1055 = vmatpush1.bf16.msra.mxu0 0
  %1056 = vmatprep.subr.bf16.mxu0 0
  %1057 = vmatpush1.bf16.msra.mxu0 0
  %1058 = vmatprep.subr.bf16.mxu0 0
  %1059 = vmatpush1.bf16.msra.mxu0 0
  %1060 = vmatprep.subr.bf16.mxu0 0
  %1061 = vmatpush1.bf16.msra.mxu0 0
  %1062 = vmatprep.subr.bf16.mxu0 0
  %1063 = vmatpush1.bf16.msra.mxu0 0
  %1064 = vmatprep.subr.bf16.mxu0 0
  %1065 = vmatpush1.bf16.msra.mxu0 0
  %1066 = vmatprep.subr.bf16.mxu0 0
  %1067 = vmatpush1.bf16.msra.mxu0 0
  %1068 = vmatprep.subr.bf16.mxu0 0
  %1069 = vmatpush1.bf16.msra.mxu0 0
  %1070 = vmatprep.subr.bf16.mxu0 0
  %1071 = vmatpush1.bf16.msra.mxu0 0
  %1072 = vmatprep.subr.bf16.mxu0 0
  %1073 = vmatpush1.bf16.msra.mxu0 0
  %1074 = vmatprep.subr.bf16.mxu0 0
  %1075 = vmatpush1.bf16.msra.mxu0 0
  %1076 = vmatprep.subr.bf16.mxu0 0
  %1077 = vmatpush1.bf16.msra.mxu0 0
  %1078 = vmatprep.mubr.bf16.mxu0 0
  %1079 = vmatmul.mubr.bf16.gmra.mrb[0].mxu0 %v1044
  %v1080 = vpop.f32.mrb[0].mxu0
  %v1081 = vadd.f32 0.0, %v1080
  %v1082 = vpop.f32.mrb[0].mxu0
  %v1083 = vpop.f32.mrb[0].mxu0
  %v1084 = vpop.f32.mrb[0].mxu0
  %1085 = vdwg.mxu0
  %v1086 = vadd.f32 %v1038, %v1081
  %v1087 = vtanh.pop %v1086
  %v1088 = vmul.f32 %v1087, %v40
  %v1089 = vadd.f32 %v1088, %v41
  %v1090 = vmul.f32 %v1089, %v1026
  %1092 = vrot.lane.b32.xlu0 %v1089, 64
  %v1093 = vpop.permute.xlu0 %1092
  %v1095 = vmul.f32 %v1089, %v1093
  %1097 = vrot.lane.b32.xlu0 %v1095, 32
  %v1098 = vpop.permute.xlu0 %1097
  %v1100 = vadd.f32 %v1090, %v1098
  %v1101 = vtanh.pop %v1100
  %1103 = vrot.lane.b32.xlu0 %v1101, 64
  %v1104 = vpop.permute.xlu0 %1103
  %v1106 = vmul.f32 %v1089, %v1104
  %1108 = vrot.lane.b32.xlu0 %v1106, 32
  %v1109 = vpop.permute.xlu0 %1108
  %1111 = vst.msk [vmem:[%s351] sm:$0xff] %vm207, %v1109
  %v1112 = vld [vmem:[%s353] sm:$0xff]
  %v1113 = vpack.c.bf16 %v1106, %v1106
  %1115 = vrot.lane.b32.xlu0 %v1113, 32
  %v1116 = vpop.permute.xlu0 %1115
  %v1118 = vsel %vm207, %v1116, 0
  %1120 = vmatprep.subr.bf16.mxu0 0
  %1121 = vmatpush1.bf16.msra.mxu0 %v817
  %1122 = vmatprep.subr.bf16.mxu0 0
  %1123 = vmatpush1.bf16.msra.mxu0 %v818
  %1124 = vmatprep.subr.bf16.mxu0 0
  %1125 = vmatpush1.bf16.msra.mxu0 0
  %1126 = vmatprep.subr.bf16.mxu0 0
  %1127 = vmatpush1.bf16.msra.mxu0 0
  %1128 = vmatprep.subr.bf16.mxu0 0
  %1129 = vmatpush1.bf16.msra.mxu0 0
  %1130 = vmatprep.subr.bf16.mxu0 0
  %1131 = vmatpush1.bf16.msra.mxu0 0
  %1132 = vmatprep.subr.bf16.mxu0 0
  %1133 = vmatpush1.bf16.msra.mxu0 0
  %1134 = vmatprep.subr.bf16.mxu0 0
  %1135 = vmatpush1.bf16.msra.mxu0 0
  %1136 = vmatprep.subr.bf16.mxu0 0
  %1137 = vmatpush1.bf16.msra.mxu0 0
  %1138 = vmatprep.subr.bf16.mxu0 0
  %1139 = vmatpush1.bf16.msra.mxu0 0
  %1140 = vmatprep.subr.bf16.mxu0 0
  %1141 = vmatpush1.bf16.msra.mxu0 0
  %1142 = vmatprep.subr.bf16.mxu0 0
  %1143 = vmatpush1.bf16.msra.mxu0 0
  %1144 = vmatprep.subr.bf16.mxu0 0
  %1145 = vmatpush1.bf16.msra.mxu0 0
  %1146 = vmatprep.subr.bf16.mxu0 0
  %1147 = vmatpush1.bf16.msra.mxu0 0
  %1148 = vmatprep.subr.bf16.mxu0 0
  %1149 = vmatpush1.bf16.msra.mxu0 0
  %1150 = vmatprep.subr.bf16.mxu0 0
  %1151 = vmatpush1.bf16.msra.mxu0 0
  %1152 = vmatprep.mubr.bf16.mxu0 0
  %1153 = vmatmul.mubr.bf16.gmra.mrb[0].mxu0 %v1118
  %v1154 = vpop.f32.mrb[0].mxu0
  %v1155 = vadd.f32 0.0, %v1154
  %v1156 = vpop.f32.mrb[0].mxu0
  %v1157 = vpop.f32.mrb[0].mxu0
  %v1158 = vpop.f32.mrb[0].mxu0
  %1159 = vdwg.mxu0
  %v1160 = vadd.f32 %v1112, %v1155
  %v1161 = vtanh.pop %v1160
  %v1162 = vmul.f32 %v1161, %v40
  %v1163 = vadd.f32 %v1162, %v41
  %v1164 = vmul.f32 %v1163, %v1100
  %1166 = vrot.lane.b32.xlu0 %v1163, 64
  %v1167 = vpop.permute.xlu0 %1166
  %v1169 = vmul.f32 %v1163, %v1167
  %1171 = vrot.lane.b32.xlu0 %v1169, 32
  %v1172 = vpop.permute.xlu0 %1171
  %v1174 = vadd.f32 %v1164, %v1172
  %v1175 = vtanh.pop %v1174
  %1177 = vrot.lane.b32.xlu0 %v1175, 64
  %v1178 = vpop.permute.xlu0 %1177
  %v1180 = vmul.f32 %v1163, %v1178
  %1182 = vrot.lane.b32.xlu0 %v1180, 32
  %v1183 = vpop.permute.xlu0 %1182
  %1185 = vst.msk [vmem:[%s427] sm:$0xff] %vm207, %v1183
  %v1186 = vld [vmem:[%s429] sm:$0xff]
  %v1187 = vpack.c.bf16 %v1180, %v1180
  %1189 = vrot.lane.b32.xlu0 %v1187, 32
  %v1190 = vpop.permute.xlu0 %1189
  %v1192 = vsel %vm207, %v1190, 0
  %1194 = vmatprep.subr.bf16.mxu0 0
  %1195 = vmatpush1.bf16.msra.mxu0 %v817
  %1196 = vmatprep.subr.bf16.mxu0 0
  %1197 = vmatpush1.bf16.msra.mxu0 %v818
  %1198 = vmatprep.subr.bf16.mxu0 0
  %1199 = vmatpush1.bf16.msra.mxu0 0
  %1200 = vmatprep.subr.bf16.mxu0 0
  %1201 = vmatpush1.bf16.msra.mxu0 0
  %1202 = vmatprep.subr.bf16.mxu0 0
  %1203 = vmatpush1.bf16.msra.mxu0 0
  %1204 = vmatprep.subr.bf16.mxu0 0
  %1205 = vmatpush1.bf16.msra.mxu0 0
  %1206 = vmatprep.subr.bf16.mxu0 0
  %1207 = vmatpush1.bf16.msra.mxu0 0
  %1208 = vmatprep.subr.bf16.mxu0 0
  %1209 = vmatpush1.bf16.msra.mxu0 0
  %1210 = vmatprep.subr.bf16.mxu0 0
  %1211 = vmatpush1.bf16.msra.mxu0 0
  %1212 = vmatprep.subr.bf16.mxu0 0
  %1213 = vmatpush1.bf16.msra.mxu0 0
  %1214 = vmatprep.subr.bf16.mxu0 0
  %1215 = vmatpush1.bf16.msra.mxu0 0
  %1216 = vmatprep.subr.bf16.mxu0 0
  %1217 = vmatpush1.bf16.msra.mxu0 0
  %1218 = vmatprep.subr.bf16.mxu0 0
  %1219 = vmatpush1.bf16.msra.mxu0 0
  %1220 = vmatprep.subr.bf16.mxu0 0
  %1221 = vmatpush1.bf16.msra.mxu0 0
  %1222 = vmatprep.subr.bf16.mxu0 0
  %1223 = vmatpush1.bf16.msra.mxu0 0
  %1224 = vmatprep.subr.bf16.mxu0 0
  %1225 = vmatpush1.bf16.msra.mxu0 0
  %1226 = vmatprep.mubr.bf16.mxu0 0
  %1227 = vmatmul.mubr.bf16.gmra.mrb[0].mxu0 %v1192
  %v1228 = vpop.f32.mrb[0].mxu0
  %v1229 = vadd.f32 0.0, %v1228
  %v1230 = vpop.f32.mrb[0].mxu0
  %v1231 = vpop.f32.mrb[0].mxu0
  %v1232 = vpop.f32.mrb[0].mxu0
  %1233 = vdwg.mxu0
  %v1234 = vadd.f32 %v1186, %v1229
  %v1235 = vtanh.pop %v1234
  %v1236 = vmul.f32 %v1235, %v40
  %v1237 = vadd.f32 %v1236, %v41
  %v1238 = vmul.f32 %v1237, %v1174
  %1240 = vrot.lane.b32.xlu0 %v1237, 64
  %v1241 = vpop.permute.xlu0 %1240
  %v1243 = vmul.f32 %v1237, %v1241
  %1245 = vrot.lane.b32.xlu0 %v1243, 32
  %v1246 = vpop.permute.xlu0 %1245
  %v1248 = vadd.f32 %v1238, %v1246
  %v1249 = vtanh.pop %v1248
  %1251 = vrot.lane.b32.xlu0 %v1249, 64
  %v1252 = vpop.permute.xlu0 %1251
  %v1254 = vmul.f32 %v1237, %v1252
  %1256 = vrot.lane.b32.xlu0 %v1254, 32
  %v1257 = vpop.permute.xlu0 %1256
  %1259 = vst.msk [vmem:[%s503] sm:$0xff] %vm207, %v1257
  %v1260 = vld [vmem:[%s505] sm:$0xff]
  %v1261 = vpack.c.bf16 %v1254, %v1254
  %1263 = vrot.lane.b32.xlu0 %v1261, 32
  %v1264 = vpop.permute.xlu0 %1263
  %v1266 = vsel %vm207, %v1264, 0
  %1268 = vmatprep.subr.bf16.mxu0 0
  %1269 = vmatpush1.bf16.msra.mxu0 %v817
  %1270 = vmatprep.subr.bf16.mxu0 0
  %1271 = vmatpush1.bf16.msra.mxu0 %v818
  %1272 = vmatprep.subr.bf16.mxu0 0
  %1273 = vmatpush1.bf16.msra.mxu0 0
  %1274 = vmatprep.subr.bf16.mxu0 0
  %1275 = vmatpush1.bf16.msra.mxu0 0
  %1276 = vmatprep.subr.bf16.mxu0 0
  %1277 = vmatpush1.bf16.msra.mxu0 0
  %1278 = vmatprep.subr.bf16.mxu0 0
  %1279 = vmatpush1.bf16.msra.mxu0 0
  %1280 = vmatprep.subr.bf16.mxu0 0
  %1281 = vmatpush1.bf16.msra.mxu0 0
  %1282 = vmatprep.subr.bf16.mxu0 0
  %1283 = vmatpush1.bf16.msra.mxu0 0
  %1284 = vmatprep.subr.bf16.mxu0 0
  %1285 = vmatpush1.bf16.msra.mxu0 0
  %1286 = vmatprep.subr.bf16.mxu0 0
  %1287 = vmatpush1.bf16.msra.mxu0 0
  %1288 = vmatprep.subr.bf16.mxu0 0
  %1289 = vmatpush1.bf16.msra.mxu0 0
  %1290 = vmatprep.subr.bf16.mxu0 0
  %1291 = vmatpush1.bf16.msra.mxu0 0
  %1292 = vmatprep.subr.bf16.mxu0 0
  %1293 = vmatpush1.bf16.msra.mxu0 0
  %1294 = vmatprep.subr.bf16.mxu0 0
  %1295 = vmatpush1.bf16.msra.mxu0 0
  %1296 = vmatprep.subr.bf16.mxu0 0
  %1297 = vmatpush1.bf16.msra.mxu0 0
  %1298 = vmatprep.subr.bf16.mxu0 0
  %1299 = vmatpush1.bf16.msra.mxu0 0
  %1300 = vmatprep.mubr.bf16.mxu0 0
  %1301 = vmatmul.mubr.bf16.gmra.mrb[0].mxu0 %v1266
  %v1302 = vpop.f32.mrb[0].mxu0
  %v1303 = vadd.f32 0.0, %v1302
  %v1304 = vpop.f32.mrb[0].mxu0
  %v1305 = vpop.f32.mrb[0].mxu0
  %v1306 = vpop.f32.mrb[0].mxu0
  %1307 = vdwg.mxu0
  %v1308 = vadd.f32 %v1260, %v1303
  %v1309 = vtanh.pop %v1308
  %v1310 = vmul.f32 %v1309, %v40
  %v1311 = vadd.f32 %v1310, %v41
  %v1312 = vmul.f32 %v1311, %v1248
  %1314 = vrot.lane.b32.xlu0 %v1311, 64
  %v1315 = vpop.permute.xlu0 %1314
  %v1317 = vmul.f32 %v1311, %v1315
  %1319 = vrot.lane.b32.xlu0 %v1317, 32
  %v1320 = vpop.permute.xlu0 %1319
  %v1322 = vadd.f32 %v1312, %v1320
  %v1323 = vtanh.pop %v1322
  %1325 = vrot.lane.b32.xlu0 %v1323, 64
  %v1326 = vpop.permute.xlu0 %1325
  %v1328 = vmul.f32 %v1311, %v1326
  %1330 = vrot.lane.b32.xlu0 %v1328, 32
  %v1331 = vpop.permute.xlu0 %1330
  %1333 = vst.msk [vmem:[%s579] sm:$0xff] %vm207, %v1331
  %v1334 = vld [vmem:[%s581] sm:$0xff]
  %v1335 = vpack.c.bf16 %v1328, %v1328
  %1337 = vrot.lane.b32.xlu0 %v1335, 32
  %v1338 = vpop.permute.xlu0 %1337
  %v1340 = vsel %vm207, %v1338, 0
  %1342 = vmatprep.subr.bf16.mxu0 0
  %1343 = vmatpush1.bf16.msra.mxu0 %v817
  %1344 = vmatprep.subr.bf16.mxu0 0
  %1345 = vmatpush1.bf16.msra.mxu0 %v818
  %1346 = vmatprep.subr.bf16.mxu0 0
  %1347 = vmatpush1.bf16.msra.mxu0 0
  %1348 = vmatprep.subr.bf16.mxu0 0
  %1349 = vmatpush1.bf16.msra.mxu0 0
  %1350 = vmatprep.subr.bf16.mxu0 0
  %1351 = vmatpush1.bf16.msra.mxu0 0
  %1352 = vmatprep.subr.bf16.mxu0 0
  %1353 = vmatpush1.bf16.msra.mxu0 0
  %1354 = vmatprep.subr.bf16.mxu0 0
  %1355 = vmatpush1.bf16.msra.mxu0 0
  %1356 = vmatprep.subr.bf16.mxu0 0
  %1357 = vmatpush1.bf16.msra.mxu0 0
  %1358 = vmatprep.subr.bf16.mxu0 0
  %1359 = vmatpush1.bf16.msra.mxu0 0
  %1360 = vmatprep.subr.bf16.mxu0 0
  %1361 = vmatpush1.bf16.msra.mxu0 0
  %1362 = vmatprep.subr.bf16.mxu0 0
  %1363 = vmatpush1.bf16.msra.mxu0 0
  %1364 = vmatprep.subr.bf16.mxu0 0
  %1365 = vmatpush1.bf16.msra.mxu0 0
  %1366 = vmatprep.subr.bf16.mxu0 0
  %1367 = vmatpush1.bf16.msra.mxu0 0
  %1368 = vmatprep.subr.bf16.mxu0 0
  %1369 = vmatpush1.bf16.msra.mxu0 0
  %1370 = vmatprep.subr.bf16.mxu0 0
  %1371 = vmatpush1.bf16.msra.mxu0 0
  %1372 = vmatprep.subr.bf16.mxu0 0
  %1373 = vmatpush1.bf16.msra.mxu0 0
  %1374 = vmatprep.mubr.bf16.mxu0 0
  %1375 = vmatmul.mubr.bf16.gmra.mrb[0].mxu0 %v1340
  %v1376 = vpop.f32.mrb[0].mxu0
  %v1377 = vadd.f32 0.0, %v1376
  %v1378 = vpop.f32.mrb[0].mxu0
  %v1379 = vpop.f32.mrb[0].mxu0
  %v1380 = vpop.f32.mrb[0].mxu0
  %1381 = vdwg.mxu0
  %v1382 = vadd.f32 %v1334, %v1377
  %v1383 = vtanh.pop %v1382
  %v1384 = vmul.f32 %v1383, %v40
  %v1385 = vadd.f32 %v1384, %v41
  %v1386 = vmul.f32 %v1385, %v1322
  %1388 = vrot.lane.b32.xlu0 %v1385, 64
  %v1389 = vpop.permute.xlu0 %1388
  %v1391 = vmul.f32 %v1385, %v1389
  %1393 = vrot.lane.b32.xlu0 %v1391, 32
  %v1394 = vpop.permute.xlu0 %1393
  %v1396 = vadd.f32 %v1386, %v1394
  %v1397 = vtanh.pop %v1396
  %1399 = vrot.lane.b32.xlu0 %v1397, 64
  %v1400 = vpop.permute.xlu0 %1399
  %v1402 = vmul.f32 %v1385, %v1400
  %1404 = vrot.lane.b32.xlu0 %v1402, 32
  %v1405 = vpop.permute.xlu0 %1404
  %1407 = vst.msk [vmem:[%s655] sm:$0xff] %vm207, %v1405
  %v1408 = vld [vmem:[%s657] sm:$0xff]
  %v1409 = vpack.c.bf16 %v1402, %v1402
  %1411 = vrot.lane.b32.xlu0 %v1409, 32
  %v1412 = vpop.permute.xlu0 %1411
  %v1414 = vsel %vm207, %v1412, 0
  %1416 = vmatprep.subr.bf16.mxu0 0
  %1417 = vmatpush1.bf16.msra.mxu0 %v817
  %1418 = vmatprep.subr.bf16.mxu0 0
  %1419 = vmatpush1.bf16.msra.mxu0 %v818
  %1420 = vmatprep.subr.bf16.mxu0 0
  %1421 = vmatpush1.bf16.msra.mxu0 0
  %1422 = vmatprep.subr.bf16.mxu0 0
  %1423 = vmatpush1.bf16.msra.mxu0 0
  %1424 = vmatprep.subr.bf16.mxu0 0
  %1425 = vmatpush1.bf16.msra.mxu0 0
  %1426 = vmatprep.subr.bf16.mxu0 0
  %1427 = vmatpush1.bf16.msra.mxu0 0
  %1428 = vmatprep.subr.bf16.mxu0 0
  %1429 = vmatpush1.bf16.msra.mxu0 0
  %1430 = vmatprep.subr.bf16.mxu0 0
  %1431 = vmatpush1.bf16.msra.mxu0 0
  %1432 = vmatprep.subr.bf16.mxu0 0
  %1433 = vmatpush1.bf16.msra.mxu0 0
  %1434 = vmatprep.subr.bf16.mxu0 0
  %1435 = vmatpush1.bf16.msra.mxu0 0
  %1436 = vmatprep.subr.bf16.mxu0 0
  %1437 = vmatpush1.bf16.msra.mxu0 0
  %1438 = vmatprep.subr.bf16.mxu0 0
  %1439 = vmatpush1.bf16.msra.mxu0 0
  %1440 = vmatprep.subr.bf16.mxu0 0
  %1441 = vmatpush1.bf16.msra.mxu0 0
  %1442 = vmatprep.subr.bf16.mxu0 0
  %1443 = vmatpush1.bf16.msra.mxu0 0
  %1444 = vmatprep.subr.bf16.mxu0 0
  %1445 = vmatpush1.bf16.msra.mxu0 0
  %1446 = vmatprep.subr.bf16.mxu0 0
  %1447 = vmatpush1.bf16.msra.mxu0 0
  %1448 = vmatprep.mubr.bf16.mxu0 0
  %1449 = vmatmul.mubr.bf16.gmra.mrb[0].mxu0 %v1414
  %v1450 = vpop.f32.mrb[0].mxu0
  %v1451 = vadd.f32 0.0, %v1450
  %v1452 = vpop.f32.mrb[0].mxu0
  %v1453 = vpop.f32.mrb[0].mxu0
  %v1454 = vpop.f32.mrb[0].mxu0
  %1455 = vdwg.mxu0
  %v1456 = vadd.f32 %v1408, %v1451
  %v1457 = vtanh.pop %v1456
  %v1458 = vmul.f32 %v1457, %v40
  %v1459 = vadd.f32 %v1458, %v41
  %v1460 = vmul.f32 %v1459, %v1396
  %1462 = vrot.lane.b32.xlu0 %v1459, 64
  %v1463 = vpop.permute.xlu0 %1462
  %v1465 = vmul.f32 %v1459, %v1463
  %1467 = vrot.lane.b32.xlu0 %v1465, 32
  %v1468 = vpop.permute.xlu0 %1467
  %v1470 = vadd.f32 %v1460, %v1468
  %v1471 = vtanh.pop %v1470
  %1473 = vrot.lane.b32.xlu0 %v1471, 64
  %v1474 = vpop.permute.xlu0 %1473
  %v1476 = vmul.f32 %v1459, %v1474
  %1478 = vrot.lane.b32.xlu0 %v1476, 32
  %v1479 = vpop.permute.xlu0 %1478
  %1481 = vst.msk [vmem:[%s731] sm:$0xff] %vm207, %v1479
  %v1482 = vld [vmem:[%s733] sm:$0xff]
  %v1483 = vpack.c.bf16 %v1476, %v1476
  %1485 = vrot.lane.b32.xlu0 %v1483, 32
  %v1486 = vpop.permute.xlu0 %1485
  %v1488 = vsel %vm207, %v1486, 0
  %1490 = vmatprep.subr.bf16.mxu0 0
  %1491 = vmatpush1.bf16.msra.mxu0 %v817
  %1492 = vmatprep.subr.bf16.mxu0 0
  %1493 = vmatpush1.bf16.msra.mxu0 %v818
  %1494 = vmatprep.subr.bf16.mxu0 0
  %1495 = vmatpush1.bf16.msra.mxu0 0
  %1496 = vmatprep.subr.bf16.mxu0 0
  %1497 = vmatpush1.bf16.msra.mxu0 0
  %1498 = vmatprep.subr.bf16.mxu0 0
  %1499 = vmatpush1.bf16.msra.mxu0 0
  %1500 = vmatprep.subr.bf16.mxu0 0
  %1501 = vmatpush1.bf16.msra.mxu0 0
  %1502 = vmatprep.subr.bf16.mxu0 0
  %1503 = vmatpush1.bf16.msra.mxu0 0
  %1504 = vmatprep.subr.bf16.mxu0 0
  %1505 = vmatpush1.bf16.msra.mxu0 0
  %1506 = vmatprep.subr.bf16.mxu0 0
  %1507 = vmatpush1.bf16.msra.mxu0 0
  %1508 = vmatprep.subr.bf16.mxu0 0
  %1509 = vmatpush1.bf16.msra.mxu0 0
  %1510 = vmatprep.subr.bf16.mxu0 0
  %1511 = vmatpush1.bf16.msra.mxu0 0
  %1512 = vmatprep.subr.bf16.mxu0 0
  %1513 = vmatpush1.bf16.msra.mxu0 0
  %1514 = vmatprep.subr.bf16.mxu0 0
  %1515 = vmatpush1.bf16.msra.mxu0 0
  %1516 = vmatprep.subr.bf16.mxu0 0
  %1517 = vmatpush1.bf16.msra.mxu0 0
  %1518 = vmatprep.subr.bf16.mxu0 0
  %1519 = vmatpush1.bf16.msra.mxu0 0
  %1520 = vmatprep.subr.bf16.mxu0 0
  %1521 = vmatpush1.bf16.msra.mxu0 0
  %1522 = vmatprep.mubr.bf16.mxu0 0
  %1523 = vmatmul.mubr.bf16.gmra.mrb[0].mxu0 %v1488
  %v1524 = vpop.f32.mrb[0].mxu0
  %v1525 = vadd.f32 0.0, %v1524
  %v1526 = vpop.f32.mrb[0].mxu0
  %v1527 = vpop.f32.mrb[0].mxu0
  %v1528 = vpop.f32.mrb[0].mxu0
  %1529 = vdwg.mxu0
  %v1530 = vadd.f32 %v1482, %v1525
  %v1531 = vtanh.pop %v1530
  %v1532 = vmul.f32 %v1531, %v40
  %v1533 = vadd.f32 %v1532, %v41
  %v1534 = vmul.f32 %v1533, %v1470
  %1536 = vrot.lane.b32.xlu0 %v1533, 64
  %v1537 = vpop.permute.xlu0 %1536
  %v1539 = vmul.f32 %v1533, %v1537
  %1541 = vrot.lane.b32.xlu0 %v1539, 32
  %v1542 = vpop.permute.xlu0 %1541
  %v1544 = vadd.f32 %v1534, %v1542
  %v1545 = vtanh.pop %v1544
  %1547 = vrot.lane.b32.xlu0 %v1545, 64
  %v1548 = vpop.permute.xlu0 %1547
  %v1550 = vmul.f32 %v1533, %v1548
  %1552 = vrot.lane.b32.xlu0 %v1550, 32
  %v1553 = vpop.permute.xlu0 %1552
  %1555 = vst.msk [vmem:[%s807] sm:$0xff] %vm207, %v1553
  %v1556 = vld [vmem:[%s7] sm:$0xff]
  %v1557 = vld [vmem:[%s7 + $0x8] sm:$0xff]
  %v1558 = vld [vmem:[%s7 + $0x10] sm:$0xff]
  %v1559 = vld [vmem:[%s7 + $0x18] sm:$0xff]
  %v1560 = vld [vmem:[#allocation4] sm:$0x1]
  %v1562 = vlaneseq
  %v1563 = vshrl.u32 %v1562, 7
  %v1564 = vsub.s32 0, %v1563
  %v1565 = vrot.slane %v1560, %v1564
  %v1567 = vsel %vm207, %v1553, 0
  %1569 = vmatprep.subr.mxu0 0.0
  %1570 = vmatpush1.msra.mxu0 %v1556
  %1571 = vmatprep.subr.mxu0 0.0
  %1572 = vmatpush1.msra.mxu0 %v1557
  %1573 = vmatprep.subr.mxu0 0.0
  %1574 = vmatpush1.msra.mxu0 %v1558
  %1575 = vmatprep.subr.mxu0 0.0
  %1576 = vmatpush1.msra.mxu0 %v1559
  %1577 = vmatprep.subr.mxu0 0.0
  %1578 = vmatpush1.msra.mxu0 0.0
  %1579 = vmatprep.subr.mxu0 0.0
  %1580 = vmatpush1.msra.mxu0 0.0
  %1581 = vmatprep.subr.mxu0 0.0
  %1582 = vmatpush1.msra.mxu0 0.0
  %1583 = vmatprep.subr.mxu0 0.0
  %1584 = vmatpush1.msra.mxu0 0.0
  %1585 = vmatprep.subr.mxu0 0.0
  %1586 = vmatpush1.msra.mxu0 0.0
  %1587 = vmatprep.subr.mxu0 0.0
  %1588 = vmatpush1.msra.mxu0 0.0
  %1589 = vmatprep.subr.mxu0 0.0
  %1590 = vmatpush1.msra.mxu0 0.0
  %1591 = vmatprep.subr.mxu0 0.0
  %1592 = vmatpush1.msra.mxu0 0.0
  %1593 = vmatprep.subr.mxu0 0.0
  %1594 = vmatpush1.msra.mxu0 0.0
  %1595 = vmatprep.subr.mxu0 0.0
  %1596 = vmatpush1.msra.mxu0 0.0
  %1597 = vmatprep.subr.mxu0 0.0
  %1598 = vmatpush1.msra.mxu0 0.0
  %1599 = vmatprep.subr.mxu0 0.0
  %1600 = vmatpush1.msra.mxu0 0.0
  %1601 = vmatprep.subr.mxu0 0.0
  %1602 = vmatpush1.msra.mxu0 0.0
  %1603 = vmatprep.subr.mxu0 0.0
  %1604 = vmatpush1.msra.mxu0 0.0
  %1605 = vmatprep.subr.mxu0 0.0
  %1606 = vmatpush1.msra.mxu0 0.0
  %1607 = vmatprep.subr.mxu0 0.0
  %1608 = vmatpush1.msra.mxu0 0.0
  %1609 = vmatprep.subr.mxu0 0.0
  %1610 = vmatpush1.msra.mxu0 0.0
  %1611 = vmatprep.subr.mxu0 0.0
  %1612 = vmatpush1.msra.mxu0 0.0
  %1613 = vmatprep.subr.mxu0 0.0
  %1614 = vmatpush1.msra.mxu0 0.0
  %1615 = vmatprep.subr.mxu0 0.0
  %1616 = vmatpush1.msra.mxu0 0.0
  %1617 = vmatprep.subr.mxu0 0.0
  %1618 = vmatpush1.msra.mxu0 0.0
  %1619 = vmatprep.subr.mxu0 0.0
  %1620 = vmatpush1.msra.mxu0 0.0
  %1621 = vmatprep.subr.mxu0 0.0
  %1622 = vmatpush1.msra.mxu0 0.0
  %1623 = vmatprep.subr.mxu0 0.0
  %1624 = vmatpush1.msra.mxu0 0.0
  %1625 = vmatprep.subr.mxu0 0.0
  %1626 = vmatpush1.msra.mxu0 0.0
  %1627 = vmatprep.subr.mxu0 0.0
  %1628 = vmatpush1.msra.mxu0 0.0
  %1629 = vmatprep.subr.mxu0 0.0
  %1630 = vmatpush1.msra.mxu0 0.0
  %1631 = vmatprep.subr.mxu0 0.0
  %1632 = vmatpush1.msra.mxu0 0.0
  %1633 = vmatprep.mubr.f32.mxu0 0.0
  %1634 = vmatmul.mubr.f32.gmra.mrb[0].mxu0 %v1567
  %v1635 = vpop.f32.mrb[0].mxu0
  %v1636 = vadd.f32 %v1565, %v1635
  %v1637 = vpop.f32.mrb[0].mxu0
  %1638 = vdwg.mxu0
  %vm1639 = vcmask 7168
  %1640 = vst.msk [vmem:[%s9] sm:$0xff] %vm1639, %v1636
  // Predicated region
  $region38: #{rnn_forward.1} parent=0 // pred_check
    _
  $region39: #{rnn_forward.1} parent=0 // pred_check_branch
    %1642 = sbr.rel (0) target = $region41
  $region40: #{rnn_forward.1} parent=0 // pred_region
    _
  $region41: #{rnn_forward.1} parent=0 // pred_fallthru
    _
  // Predicated region
  $region42: #{rnn_forward.1} parent=0 // pred_check
    _
  $region43: #{rnn_forward.1} parent=0 // pred_check_branch
    %1644 = sbr.rel (0) target = $region45
  $region44: #{rnn_forward.1} parent=0 // pred_region
    _
  $region45: #{rnn_forward.1} parent=0 // pred_fallthru
    _

</llo_original>
